<compile_context>
chip_gen: v7x
topology: tpu7x:2x2x1
jax: 0.10.0
libtpu: 0.0.40
codegen_flags: <defaults>
</compile_context>

<pallas_src>
import jax
import jax.numpy as jnp
import numpy as np
from jax import lax
from jax.experimental import pallas as pl
from jax.experimental.pallas import tpu as pltpu


def attn_trans_kernel(x_ref, wv_ref, bv_ref, wt_ref, bt_ref, t_ref, stats_ref):
    """Per grid step: v_conv + attention + trans_conv for Bblk batches.

    Writes t = trans_conv(x - x2) and the per-step BN partial statistics
    (per-channel sum and sum-of-squares over the step's Bblk * N samples).
    """
    bblk, C, N = x_ref.shape
    f32 = jnp.float32
    bf16 = jnp.bfloat16

    wv = wv_ref[...]            # (C, C) bf16, resident across the step
    wt = wt_ref[...]
    bv = bv_ref[...]            # (C, 1) f32
    bt = bt_ref[...]

    def body(b, carry):
        s, sq = carry
        x = x_ref[b]                                                    # (C, N) f32
        x_bf = x.astype(bf16)

        # x0 = v_conv(x): 1x1 conv == channel matmul (bf16 MXU, f32 acc).
        x0 = jnp.dot(wv, x_bf, preferred_element_type=f32) + bv        # (C, N)
        x0_bf = x0.astype(bf16)

        # energy[i, j] = sum_c x[c, i] * x0[c, j] -- trans_a dot_general, no
        # materialized f32 transpose.
        energy = lax.dot_general(
            x_bf, x0_bf,
            dimension_numbers=(((0,), (0,)), ((), ())),
            preferred_element_type=f32)                                 # (N, N)

        # Softmax over j without materializing p: fold the row reciprocal
        # into x0's columns; compute the dim=1 column sum via an MXU matvec.
        m = jnp.max(energy, axis=-1, keepdims=True)                     # (N, 1)
        e = jnp.exp(energy - m)                                         # (N, N) f32
        row_sum = jnp.sum(e, axis=-1, keepdims=True)                    # (N, 1)
        rr = jnp.transpose(pl.reciprocal(row_sum, approx=True))         # (1, N)
        e_bf = e.astype(bf16)                                           # single cast

        # colp[n] = sum_i p[i, n] = sum_i rr[i] * e[i, n]   (MXU matvec)
        colp = jnp.dot(rr.astype(bf16), e_bf, preferred_element_type=f32)   # (1, N)
        r_col = 1.0 / (1e-9 + colp)          # exact division (tiny vector)

        # x2[c, n] = r_col[n] * sum_i (x0[c, i] * rr[i]) * e[i, n]
        x0s_bf = (x0 * rr).astype(bf16)                                 # (C, N)
        x2 = jnp.dot(x0s_bf, e_bf, preferred_element_type=f32) * r_col  # (C, N)

        # t = trans_conv(x - x2)
        d_bf = (x - x2).astype(bf16)
        t = jnp.dot(wt, d_bf, preferred_element_type=f32) + bt          # (C, N)

        t_ref[b] = t
        s = s + jnp.sum(t, axis=-1, keepdims=True)                      # (C, 1)
        sq = sq + jnp.sum(t * t, axis=-1, keepdims=True)                # (C, 1)
        return s, sq

    zero = jnp.zeros((C, 1), f32)
    s, sq = lax.fori_loop(0, bblk, body, (zero, zero), unroll=True)
    stats_ref[:, 0:1] = s       # stats_ref: (C, 2)  (leading grid dim squeezed)
    stats_ref[:, 1:2] = sq


def bn_residual_kernel(x_ref, t_ref, pp_ref, o_ref):
    """out = x + alpha * relu(t * scale + shift) + beta  (per-channel params)."""
    pp = pp_ref[...]                                   # (4, C, 1) f32
    scale, shift = pp[0:1], pp[1:2]                    # (1, C, 1) each
    alpha, beta = pp[2:3], pp[3:4]
    x_r = jnp.maximum(t_ref[...] * scale + shift, 0.0)
    o_ref[...] = x_ref[...] + alpha * x_r + beta


def _physical_vmem_bytes():
    try:
        info = pltpu.get_tpu_info()
        for attr in ("vmem_capacity_bytes", "vmem_size_bytes", "vmem_bytes"):
            v = getattr(info, attr, None)
            if v:
                return int(v)
    except Exception:
        pass
    return 64 << 20            # conservative default: v7x per-TensorCore VMEM


def _largest_divisor_leq(n, k):
    k = max(1, min(n, k))
    while n % k:
        k -= 1
    return k


def _attn_step_vmem(bblk, C, N):
    nn = N * N * (4 + 2)                  # f32 exp slab + its single bf16 cast
    cn = 16 * C * N * 4                   # per-batch (C, N) temporaries (conservative)
    io = 2 * 2 * bblk * C * N * 4         # double-buffered x-in and t-out tiles
    w = 2 * (2 * C * C * 2 + 2 * C * 4)   # weights + biases, double-buffered
    return nn + cn + io + w + (1 << 20)


def _bn_step_vmem(bblk, C, N):
    return 3 * 2 * bblk * C * N * 4 + 4 * C * 4 + (1 << 20)


@jax.jit
def point_sac_forward(x, params):
    """x: (B, C, N) float32, same layout as the PyTorch module."""
    B, C, N = x.shape
    f32 = jnp.float32

    wv_bf = params['wv'].astype(jnp.bfloat16)       # (C_out, C_in)
    wt_bf = params['wt'].astype(jnp.bfloat16)
    bv = params['bv'].reshape(C, 1).astype(f32)
    bt = params['bt'].reshape(C, 1).astype(f32)

    # Per-generation VMEM budget: 75% of per-TC physical VMEM (~48 MiB v7x,
    # ~96 MiB v5e/v6e) so the compiler keeps headroom for its own tiles.
    cap = (_physical_vmem_bytes() * 3) // 4

    # Pack batches per grid step (target ~1 MiB of x per step) while keeping
    # the (N, N) attention working set inside the budget.
    bblk = _largest_divisor_leq(B, max(1, (1 << 20) // (C * N * 4)))
    while bblk > 1 and _attn_step_vmem(bblk, C, N) > cap:
        bblk = _largest_divisor_leq(B, bblk - 1)
    # TODO(synk): for N large enough that even bblk=1 overflows `cap`, add
    # query-tiling of the (N, N) slab (two-pass column sum for the dim=1
    # renorm) and expose the row tile as an extra ("parallel") grid axis.
    vmem1 = int(min(cap, max(2 * _attn_step_vmem(bblk, C, N), 16 << 20)))
    steps1 = B // bblk

    t_out, stats = pl.pallas_call(
        attn_trans_kernel,
        grid=(steps1,),
        in_specs=[
            pl.BlockSpec((bblk, C, N), lambda g: (g, 0, 0)),    # x
            pl.BlockSpec((C, C), lambda g: (0, 0)),             # wv (bf16)
            pl.BlockSpec((C, 1), lambda g: (0, 0)),             # bv
            pl.BlockSpec((C, C), lambda g: (0, 0)),             # wt (bf16)
            pl.BlockSpec((C, 1), lambda g: (0, 0)),             # bt
        ],
        out_specs=[
            pl.BlockSpec((bblk, C, N), lambda g: (g, 0, 0)),    # t (N lane-dense)
            pl.BlockSpec((None, C, 2), lambda g: (g, 0, 0)),    # per-step (sum, sumsq)
        ],
        out_shape=[
            jax.ShapeDtypeStruct((B, C, N), f32),
            jax.ShapeDtypeStruct((steps1, C, 2), f32),
        ],
        compiler_params=pltpu.CompilerParams(
            dimension_semantics=("parallel",),
            vmem_limit_bytes=vmem1),
    )(x, wv_bf, bv, wt_bf, bt)

    # BatchNorm1d training-mode batch statistics (biased variance, eps=1e-5);
    # the cross-step reduce is only steps1 * C * 2 floats -> plain JAX.
    # TODO(synk): E[x^2]-E[x]^2 can cancel for |mean| >> std; a Welford-style
    # combine over per-step centered stats would be more robust.
    cnt = B * N
    mean = jnp.sum(stats[:, :, 0], axis=0) / cnt
    ex2 = jnp.sum(stats[:, :, 1], axis=0) / cnt
    var = jnp.maximum(ex2 - mean * mean, 0.0)
    inv = lax.rsqrt(var + 1e-5)
    scale = params['bn_gamma'] * inv
    shift = params['bn_beta'] - scale * mean
    pp = jnp.stack(
        [scale, shift, params['affine_alpha'], params['affine_beta']],
        axis=0).reshape(4, C, 1).astype(f32)

    bblk2 = _largest_divisor_leq(B, max(1, (4 << 20) // (C * N * 4)))
    while bblk2 > 1 and _bn_step_vmem(bblk2, C, N) > cap:
        bblk2 = _largest_divisor_leq(B, bblk2 - 1)
    vmem2 = int(min(cap, max(2 * _bn_step_vmem(bblk2, C, N), 16 << 20)))
    steps2 = B // bblk2

    out = pl.pallas_call(
        bn_residual_kernel,
        grid=(steps2,),
        in_specs=[
            pl.BlockSpec((bblk2, C, N), lambda g: (g, 0, 0)),   # x
            pl.BlockSpec((bblk2, C, N), lambda g: (g, 0, 0)),   # t
            pl.BlockSpec((4, C, 1), lambda g: (0, 0, 0)),       # packed BN/affine
        ],
        out_specs=pl.BlockSpec((bblk2, C, N), lambda g: (g, 0, 0)),
        out_shape=jax.ShapeDtypeStruct((B, C, N), f32),
        # Reuse t's HBM buffer for the output (t is dead after this kernel).
        input_output_aliases={1: 0},
        compiler_params=pltpu.CompilerParams(
            dimension_semantics=("parallel",),
            vmem_limit_bytes=vmem2),
    )(x, t_out, pp)
    return out


def point_sac_reference(x, p):
    """Pure-JAX reference mirroring the PyTorch forward (B, C, N layout)."""
    B, C, N = x.shape
    x0 = jnp.einsum('ck,bkn->bcn', p['wv'], x) + p['bv'].reshape(1, C, 1)
    x1 = jnp.transpose(x, (0, 2, 1))
    energy = jnp.einsum('bnc,bcm->bnm', x1, x0)
    attn = jax.nn.softmax(energy, axis=-1)
    attn = attn / (1e-9 + jnp.sum(attn, axis=1, keepdims=True))
    x2 = jnp.einsum('bcj,bjn->bcn', x0, attn)
    t = jnp.einsum('ck,bkn->bcn', p['wt'], x - x2) + p['bt'].reshape(1, C, 1)
    mean = jnp.mean(t, axis=(0, 2), keepdims=True)
    var = jnp.mean((t - mean) ** 2, axis=(0, 2), keepdims=True)
    tn = (t - mean) / jnp.sqrt(var + 1e-5)
    x_r = jax.nn.relu(tn * p['bn_gamma'].reshape(1, C, 1)
                      + p['bn_beta'].reshape(1, C, 1))
    return x + p['affine_alpha'].reshape(1, C, 1) * x_r \
             + p['affine_beta'].reshape(1, C, 1)


if __name__ == "__main__":
    B, C, N = 2, 32, 128
    key = jax.random.PRNGKey(0)
    k1, k2, k3, k4, k5 = jax.random.split(key, 5)

    params = {
        # Conv1d(C, C, 1): weight (C_out, C_in), bias (C,)
        'wv': jax.random.normal(k1, (C, C), jnp.float32) * 0.1,
        'bv': jax.random.normal(k2, (C,), jnp.float32) * 0.1,
        'wt': jax.random.normal(k3, (C, C), jnp.float32) * 0.1,
        'bt': jax.random.normal(k4, (C,), jnp.float32) * 0.1,
        # BatchNorm1d affine params (default init)
        'bn_gamma': jnp.ones((C,), jnp.float32),
        'bn_beta': jnp.zeros((C,), jnp.float32),
        # affine_alpha = ones([1,C,1]), affine_beta = zeros([1,C,1])
        'affine_alpha': jnp.ones((C,), jnp.float32),
        'affine_beta': jnp.zeros((C,), jnp.float32),
    }

    x = jax.random.normal(k5, (B, C, N), jnp.float32)

    out = jax.block_until_ready(point_sac_forward(x, params))
    ref = jax.block_until_ready(point_sac_reference(x, params))
    # bf16 MXU operands + approx softmax reciprocal -> slightly looser tol.
    np.testing.assert_allclose(np.asarray(out), np.asarray(ref),
                               rtol=5e-2, atol=5e-2)

    print("KERNEL_OK")
</pallas_src>

<mosaic_0001>
module attributes {stable_mosaic.version = 11 : i64} {
  func.func @attn_trans_kernel(%arg0: i32, %arg1: memref<2x32x128xf32, #tpu.memory_space<vmem>>, %arg2: memref<32x32xbf16, #tpu.memory_space<vmem>>, %arg3: memref<32x1xf32, #tpu.memory_space<vmem>>, %arg4: memref<32x32xbf16, #tpu.memory_space<vmem>>, %arg5: memref<32x1xf32, #tpu.memory_space<vmem>>, %arg6: memref<2x32x128xf32, #tpu.memory_space<vmem>>, %arg7: memref<1x32x2xf32, #tpu.memory_space<vmem>>) attributes {dimension_semantics = [#tpu.dimension_semantics<parallel>], iteration_bounds = array<i64: 1>, scalar_prefetch = 0 : i64, scratch_operands = 0 : i64, tpu.core_type = #tpu.core_type<tc>, window_params = [{transform_indices = @transform_0, window_bounds = array<i64: 2, 32, 128>}, {pipeline_mode = #tpu.pipeline_mode<synchronous>, transform_indices = @transform_1, window_bounds = array<i64: 32, 32>}, {pipeline_mode = #tpu.pipeline_mode<synchronous>, transform_indices = @transform_2, window_bounds = array<i64: 32, 1>}, {pipeline_mode = #tpu.pipeline_mode<synchronous>, transform_indices = @transform_3, window_bounds = array<i64: 32, 32>}, {pipeline_mode = #tpu.pipeline_mode<synchronous>, transform_indices = @transform_4, window_bounds = array<i64: 32, 1>}, {transform_indices = @transform_5, window_bounds = array<i64: 2, 32, 128>}, {transform_indices = @transform_6, window_bounds = array<i64: 1, 32, 2>}]} {
    %c0 = arith.constant 0 : index
    %c0_0 = arith.constant 0 : index
    %0 = vector.load %arg2[%c0, %c0_0] : memref<32x32xbf16, #tpu.memory_space<vmem>>, vector<32x32xbf16>
    %c0_1 = arith.constant 0 : index
    %c0_2 = arith.constant 0 : index
    %1 = vector.load %arg4[%c0_1, %c0_2] : memref<32x32xbf16, #tpu.memory_space<vmem>>, vector<32x32xbf16>
    %c0_3 = arith.constant 0 : index
    %c0_4 = arith.constant 0 : index
    %2 = vector.load %arg3[%c0_3, %c0_4] : memref<32x1xf32, #tpu.memory_space<vmem>>, vector<32x1xf32>
    %c0_5 = arith.constant 0 : index
    %c0_6 = arith.constant 0 : index
    %3 = vector.load %arg5[%c0_5, %c0_6] : memref<32x1xf32, #tpu.memory_space<vmem>>, vector<32x1xf32>
    %cst = arith.constant 0.000000e+00 : f32
    %4 = vector.broadcast %cst : f32 to vector<32x1xf32>
    %c0_i32 = arith.constant 0 : i32
    %5 = arith.index_cast %c0_i32 : i32 to index
    %c0_7 = arith.constant 0 : index
    %c0_8 = arith.constant 0 : index
    %6 = vector.load %arg1[%5, %c0_7, %c0_8] : memref<2x32x128xf32, #tpu.memory_space<vmem>>, vector<1x32x128xf32>
    %7 = vector.shape_cast %6 : vector<1x32x128xf32> to vector<32x128xf32>
    %8 = arith.truncf %7 : vector<32x128xf32> to vector<32x128xbf16>
    %cst_9 = arith.constant dense<0.000000e+00> : vector<32x128xf32>
    %9 = tpu.matmul %0, %8, %cst_9 {dimension_numbers = #tpu.dot_dimension_numbers<[1], [0], [0], [1], [0, 0, 1, 1], [], []>} : vector<32x32xbf16>, vector<32x128xbf16>, vector<32x128xf32> -> vector<32x128xf32>
    %10 = vector.broadcast %2 : vector<32x1xf32> to vector<32x128xf32>
    %11 = arith.addf %9, %10 : vector<32x128xf32>
    %12 = arith.truncf %11 : vector<32x128xf32> to vector<32x128xbf16>
    %cst_10 = arith.constant dense<0.000000e+00> : vector<128x128xf32>
    %13 = tpu.matmul %8, %12, %cst_10 {dimension_numbers = #tpu.dot_dimension_numbers<[0], [0], [1], [1], [0, 1, 1, 1], [], []>} : vector<32x128xbf16>, vector<32x128xbf16>, vector<128x128xf32> -> vector<128x128xf32>
    %cst_11 = arith.constant dense<0xFF800000> : vector<128xf32>
    %14 = vector.multi_reduction <maximumf>, %13, %cst_11 [1] : vector<128x128xf32> to vector<128xf32>
    %15 = vector.shape_cast %14 : vector<128xf32> to vector<128x1xf32>
    %16 = vector.broadcast %15 : vector<128x1xf32> to vector<128x128xf32>
    %17 = arith.subf %13, %16 : vector<128x128xf32>
    %18 = math.exp %17 : vector<128x128xf32>
    %cst_12 = arith.constant dense<0.000000e+00> : vector<128xf32>
    %19 = vector.multi_reduction <add>, %18, %cst_12 [1] : vector<128x128xf32> to vector<128xf32>
    %20 = vector.shape_cast %19 : vector<128xf32> to vector<128x1xf32>
    %21 = tpu.reciprocal %20 {approx = true} : vector<128x1xf32> -> vector<128x1xf32>
    %22 = tpu.transpose %21, [1, 0] : vector<128x1xf32> -> vector<1x128xf32>
    %23 = arith.truncf %18 : vector<128x128xf32> to vector<128x128xbf16>
    %24 = arith.truncf %22 : vector<1x128xf32> to vector<1x128xbf16>
    %cst_13 = arith.constant dense<0.000000e+00> : vector<1x128xf32>
    %25 = tpu.matmul %24, %23, %cst_13 {dimension_numbers = #tpu.dot_dimension_numbers<[1], [0], [0], [1], [0, 0, 1, 1], [], []>} : vector<1x128xbf16>, vector<128x128xbf16>, vector<1x128xf32> -> vector<1x128xf32>
    %cst_14 = arith.constant 9.99999971E-10 : f32
    %26 = vector.broadcast %cst_14 : f32 to vector<1x128xf32>
    %27 = arith.addf %26, %25 : vector<1x128xf32>
    %cst_15 = arith.constant 1.000000e+00 : f32
    %28 = vector.broadcast %cst_15 : f32 to vector<1x128xf32>
    %29 = arith.divf %28, %27 : vector<1x128xf32>
    %30 = vector.broadcast %22 : vector<1x128xf32> to vector<32x128xf32>
    %31 = arith.mulf %11, %30 : vector<32x128xf32>
    %32 = arith.truncf %31 : vector<32x128xf32> to vector<32x128xbf16>
    %cst_16 = arith.constant dense<0.000000e+00> : vector<32x128xf32>
    %33 = tpu.matmul %32, %23, %cst_16 {dimension_numbers = #tpu.dot_dimension_numbers<[1], [0], [0], [1], [0, 0, 1, 1], [], []>} : vector<32x128xbf16>, vector<128x128xbf16>, vector<32x128xf32> -> vector<32x128xf32>
    %34 = vector.broadcast %29 : vector<1x128xf32> to vector<32x128xf32>
    %35 = arith.mulf %33, %34 : vector<32x128xf32>
    %36 = arith.subf %7, %35 : vector<32x128xf32>
    %37 = arith.truncf %36 : vector<32x128xf32> to vector<32x128xbf16>
    %cst_17 = arith.constant dense<0.000000e+00> : vector<32x128xf32>
    %38 = tpu.matmul %1, %37, %cst_17 {dimension_numbers = #tpu.dot_dimension_numbers<[1], [0], [0], [1], [0, 0, 1, 1], [], []>} : vector<32x32xbf16>, vector<32x128xbf16>, vector<32x128xf32> -> vector<32x128xf32>
    %39 = vector.broadcast %3 : vector<32x1xf32> to vector<32x128xf32>
    %40 = arith.addf %38, %39 : vector<32x128xf32>
    %41 = arith.index_cast %c0_i32 : i32 to index
    %c0_18 = arith.constant 0 : index
    %c0_19 = arith.constant 0 : index
    %42 = vector.load %arg6[%41, %c0_18, %c0_19] : memref<2x32x128xf32, #tpu.memory_space<vmem>>, vector<1x32x128xf32>
    %43 = vector.shape_cast %42 : vector<1x32x128xf32> to vector<32x128xf32>
    %44 = vector.shape_cast %40 : vector<32x128xf32> to vector<1x32x128xf32>
    tpu.vector_store %arg6[%41, %c0_18, %c0_19], %44 {strides = array<i32>} : memref<2x32x128xf32, #tpu.memory_space<vmem>>, vector<1x32x128xf32>,
    %cst_20 = arith.constant dense<0.000000e+00> : vector<32xf32>
    %45 = vector.multi_reduction <add>, %40, %cst_20 [1] : vector<32x128xf32> to vector<32xf32>
    %46 = vector.shape_cast %45 : vector<32xf32> to vector<32x1xf32>
    %47 = arith.addf %4, %46 : vector<32x1xf32>
    %48 = arith.mulf %40, %40 : vector<32x128xf32>
    %cst_21 = arith.constant dense<0.000000e+00> : vector<32xf32>
    %49 = vector.multi_reduction <add>, %48, %cst_21 [1] : vector<32x128xf32> to vector<32xf32>
    %50 = vector.shape_cast %49 : vector<32xf32> to vector<32x1xf32>
    %51 = arith.addf %4, %50 : vector<32x1xf32>
    %c1_i32 = arith.constant 1 : i32
    %52 = arith.index_cast %c1_i32 : i32 to index
    %c0_22 = arith.constant 0 : index
    %c0_23 = arith.constant 0 : index
    %53 = vector.load %arg1[%52, %c0_22, %c0_23] : memref<2x32x128xf32, #tpu.memory_space<vmem>>, vector<1x32x128xf32>
    %54 = vector.shape_cast %53 : vector<1x32x128xf32> to vector<32x128xf32>
    %55 = arith.truncf %54 : vector<32x128xf32> to vector<32x128xbf16>
    %cst_24 = arith.constant dense<0.000000e+00> : vector<32x128xf32>
    %56 = tpu.matmul %0, %55, %cst_24 {dimension_numbers = #tpu.dot_dimension_numbers<[1], [0], [0], [1], [0, 0, 1, 1], [], []>} : vector<32x32xbf16>, vector<32x128xbf16>, vector<32x128xf32> -> vector<32x128xf32>
    %57 = vector.broadcast %2 : vector<32x1xf32> to vector<32x128xf32>
    %58 = arith.addf %56, %57 : vector<32x128xf32>
    %59 = arith.truncf %58 : vector<32x128xf32> to vector<32x128xbf16>
    %cst_25 = arith.constant dense<0.000000e+00> : vector<128x128xf32>
    %60 = tpu.matmul %55, %59, %cst_25 {dimension_numbers = #tpu.dot_dimension_numbers<[0], [0], [1], [1], [0, 1, 1, 1], [], []>} : vector<32x128xbf16>, vector<32x128xbf16>, vector<128x128xf32> -> vector<128x128xf32>
    %cst_26 = arith.constant dense<0xFF800000> : vector<128xf32>
    %61 = vector.multi_reduction <maximumf>, %60, %cst_26 [1] : vector<128x128xf32> to vector<128xf32>
    %62 = vector.shape_cast %61 : vector<128xf32> to vector<128x1xf32>
    %63 = vector.broadcast %62 : vector<128x1xf32> to vector<128x128xf32>
    %64 = arith.subf %60, %63 : vector<128x128xf32>
    %65 = math.exp %64 : vector<128x128xf32>
    %cst_27 = arith.constant dense<0.000000e+00> : vector<128xf32>
    %66 = vector.multi_reduction <add>, %65, %cst_27 [1] : vector<128x128xf32> to vector<128xf32>
    %67 = vector.shape_cast %66 : vector<128xf32> to vector<128x1xf32>
    %68 = tpu.reciprocal %67 {approx = true} : vector<128x1xf32> -> vector<128x1xf32>
    %69 = tpu.transpose %68, [1, 0] : vector<128x1xf32> -> vector<1x128xf32>
    %70 = arith.truncf %65 : vector<128x128xf32> to vector<128x128xbf16>
    %71 = arith.truncf %69 : vector<1x128xf32> to vector<1x128xbf16>
    %cst_28 = arith.constant dense<0.000000e+00> : vector<1x128xf32>
    %72 = tpu.matmul %71, %70, %cst_28 {dimension_numbers = #tpu.dot_dimension_numbers<[1], [0], [0], [1], [0, 0, 1, 1], [], []>} : vector<1x128xbf16>, vector<128x128xbf16>, vector<1x128xf32> -> vector<1x128xf32>
    %cst_29 = arith.constant 9.99999971E-10 : f32
    %73 = vector.broadcast %cst_29 : f32 to vector<1x128xf32>
    %74 = arith.addf %73, %72 : vector<1x128xf32>
    %cst_30 = arith.constant 1.000000e+00 : f32
    %75 = vector.broadcast %cst_30 : f32 to vector<1x128xf32>
    %76 = arith.divf %75, %74 : vector<1x128xf32>
    %77 = vector.broadcast %69 : vector<1x128xf32> to vector<32x128xf32>
    %78 = arith.mulf %58, %77 : vector<32x128xf32>
    %79 = arith.truncf %78 : vector<32x128xf32> to vector<32x128xbf16>
    %cst_31 = arith.constant dense<0.000000e+00> : vector<32x128xf32>
    %80 = tpu.matmul %79, %70, %cst_31 {dimension_numbers = #tpu.dot_dimension_numbers<[1], [0], [0], [1], [0, 0, 1, 1], [], []>} : vector<32x128xbf16>, vector<128x128xbf16>, vector<32x128xf32> -> vector<32x128xf32>
    %81 = vector.broadcast %76 : vector<1x128xf32> to vector<32x128xf32>
    %82 = arith.mulf %80, %81 : vector<32x128xf32>
    %83 = arith.subf %54, %82 : vector<32x128xf32>
    %84 = arith.truncf %83 : vector<32x128xf32> to vector<32x128xbf16>
    %cst_32 = arith.constant dense<0.000000e+00> : vector<32x128xf32>
    %85 = tpu.matmul %1, %84, %cst_32 {dimension_numbers = #tpu.dot_dimension_numbers<[1], [0], [0], [1], [0, 0, 1, 1], [], []>} : vector<32x32xbf16>, vector<32x128xbf16>, vector<32x128xf32> -> vector<32x128xf32>
    %86 = vector.broadcast %3 : vector<32x1xf32> to vector<32x128xf32>
    %87 = arith.addf %85, %86 : vector<32x128xf32>
    %88 = arith.index_cast %c1_i32 : i32 to index
    %c0_33 = arith.constant 0 : index
    %c0_34 = arith.constant 0 : index
    %89 = vector.load %arg6[%88, %c0_33, %c0_34] : memref<2x32x128xf32, #tpu.memory_space<vmem>>, vector<1x32x128xf32>
    %90 = vector.shape_cast %89 : vector<1x32x128xf32> to vector<32x128xf32>
    %91 = vector.shape_cast %87 : vector<32x128xf32> to vector<1x32x128xf32>
    tpu.vector_store %arg6[%88, %c0_33, %c0_34], %91 {strides = array<i32>} : memref<2x32x128xf32, #tpu.memory_space<vmem>>, vector<1x32x128xf32>,
    %cst_35 = arith.constant dense<0.000000e+00> : vector<32xf32>
    %92 = vector.multi_reduction <add>, %87, %cst_35 [1] : vector<32x128xf32> to vector<32xf32>
    %93 = vector.shape_cast %92 : vector<32xf32> to vector<32x1xf32>
    %94 = arith.addf %47, %93 : vector<32x1xf32>
    %95 = arith.mulf %87, %87 : vector<32x128xf32>
    %cst_36 = arith.constant dense<0.000000e+00> : vector<32xf32>
    %96 = vector.multi_reduction <add>, %95, %cst_36 [1] : vector<32x128xf32> to vector<32xf32>
    %97 = vector.shape_cast %96 : vector<32xf32> to vector<32x1xf32>
    %98 = arith.addf %51, %97 : vector<32x1xf32>
    %c2_i32 = arith.constant 2 : i32
    %c0_37 = arith.constant 0 : index
    %c0_38 = arith.constant 0 : index
    %c0_39 = arith.constant 0 : index
    %99 = vector.load %arg7[%c0_37, %c0_38, %c0_39] : memref<1x32x2xf32, #tpu.memory_space<vmem>>, vector<1x32x1xf32>
    %100 = vector.shape_cast %99 : vector<1x32x1xf32> to vector<32x1xf32>
    %101 = vector.shape_cast %94 : vector<32x1xf32> to vector<1x32x1xf32>
    tpu.vector_store %arg7[%c0_37, %c0_38, %c0_39], %101 {strides = array<i32>} : memref<1x32x2xf32, #tpu.memory_space<vmem>>, vector<1x32x1xf32>,
    %c0_40 = arith.constant 0 : index
    %c0_41 = arith.constant 0 : index
    %c1 = arith.constant 1 : index
    %102 = vector.load %arg7[%c0_40, %c0_41, %c1] : memref<1x32x2xf32, #tpu.memory_space<vmem>>, vector<1x32x1xf32>
    %103 = vector.shape_cast %102 : vector<1x32x1xf32> to vector<32x1xf32>
    %104 = vector.shape_cast %98 : vector<32x1xf32> to vector<1x32x1xf32>
    tpu.vector_store %arg7[%c0_40, %c0_41, %c1], %104 {strides = array<i32>} : memref<1x32x2xf32, #tpu.memory_space<vmem>>, vector<1x32x1xf32>,
    return
  }
  func.func @transform_0(%arg0: i32) -> (i32, i32, i32) {
    %c0_i32 = arith.constant 0 : i32
    %c0_i32_0 = arith.constant 0 : i32
    %c0_i32_1 = arith.constant 0 : i32
    return %arg0, %c0_i32, %c0_i32_0 : i32, i32, i32
  }
  func.func @transform_1(%arg0: i32) -> (i32, i32) {
    %c0_i32 = arith.constant 0 : i32
    %c0_i32_0 = arith.constant 0 : i32
    %c0_i32_1 = arith.constant 0 : i32
    return %c0_i32, %c0_i32_0 : i32, i32
  }
  func.func @transform_2(%arg0: i32) -> (i32, i32) {
    %c0_i32 = arith.constant 0 : i32
    %c0_i32_0 = arith.constant 0 : i32
    %c0_i32_1 = arith.constant 0 : i32
    return %c0_i32, %c0_i32_0 : i32, i32
  }
  func.func @transform_3(%arg0: i32) -> (i32, i32) {
    %c0_i32 = arith.constant 0 : i32
    %c0_i32_0 = arith.constant 0 : i32
    %c0_i32_1 = arith.constant 0 : i32
    return %c0_i32, %c0_i32_0 : i32, i32
  }
  func.func @transform_4(%arg0: i32) -> (i32, i32) {
    %c0_i32 = arith.constant 0 : i32
    %c0_i32_0 = arith.constant 0 : i32
    %c0_i32_1 = arith.constant 0 : i32
    return %c0_i32, %c0_i32_0 : i32, i32
  }
  func.func @transform_5(%arg0: i32) -> (i32, i32, i32) {
    %c0_i32 = arith.constant 0 : i32
    %c0_i32_0 = arith.constant 0 : i32
    %c0_i32_1 = arith.constant 0 : i32
    return %arg0, %c0_i32, %c0_i32_0 : i32, i32, i32
  }
  func.func @transform_6(%arg0: i32) -> (i32, i32, i32) {
    %c0_i32 = arith.constant 0 : i32
    %c0_i32_0 = arith.constant 0 : i32
    %c0_i32_1 = arith.constant 0 : i32
    return %arg0, %c0_i32, %c0_i32_0 : i32, i32, i32
  }
}

module attributes {stable_mosaic.version = 11 : i64} {
  func.func @bn_residual_kernel(%arg0: i32, %arg1: memref<2x32x128xf32, #tpu.memory_space<vmem>>, %arg2: memref<2x32x128xf32, #tpu.memory_space<vmem>>, %arg3: memref<4x32x1xf32, #tpu.memory_space<vmem>>, %arg4: memref<2x32x128xf32, #tpu.memory_space<vmem>>) attributes {dimension_semantics = [#tpu.dimension_semantics<parallel>], iteration_bounds = array<i64: 1>, scalar_prefetch = 0 : i64, scratch_operands = 0 : i64, tpu.core_type = #tpu.core_type<tc>, window_params = [{transform_indices = @transform_0, window_bounds = array<i64: 2, 32, 128>}, {transform_indices = @transform_1, window_bounds = array<i64: 2, 32, 128>}, {pipeline_mode = #tpu.pipeline_mode<synchronous>, transform_indices = @transform_2, window_bounds = array<i64: 4, 32, 1>}, {transform_indices = @transform_3, window_bounds = array<i64: 2, 32, 128>}]} {
    %c0 = arith.constant 0 : index
    %c0_0 = arith.constant 0 : index
    %c0_1 = arith.constant 0 : index
    %0 = vector.load %arg3[%c0, %c0_0, %c0_1] : memref<4x32x1xf32, #tpu.memory_space<vmem>>, vector<4x32x1xf32>
    %1 = vector.extract_strided_slice %0 {offsets = [0, 0, 0], sizes = [1, 32, 1], strides = [1, 1, 1]} : vector<4x32x1xf32> to vector<1x32x1xf32>
    %2 = vector.extract_strided_slice %0 {offsets = [1, 0, 0], sizes = [1, 32, 1], strides = [1, 1, 1]} : vector<4x32x1xf32> to vector<1x32x1xf32>
    %3 = vector.extract_strided_slice %0 {offsets = [2, 0, 0], sizes = [1, 32, 1], strides = [1, 1, 1]} : vector<4x32x1xf32> to vector<1x32x1xf32>
    %4 = vector.extract_strided_slice %0 {offsets = [3, 0, 0], sizes = [1, 32, 1], strides = [1, 1, 1]} : vector<4x32x1xf32> to vector<1x32x1xf32>
    %c0_2 = arith.constant 0 : index
    %c0_3 = arith.constant 0 : index
    %c0_4 = arith.constant 0 : index
    %5 = vector.load %arg2[%c0_2, %c0_3, %c0_4] : memref<2x32x128xf32, #tpu.memory_space<vmem>>, vector<2x32x128xf32>
    %6 = vector.broadcast %1 : vector<1x32x1xf32> to vector<2x32x128xf32>
    %7 = arith.mulf %5, %6 : vector<2x32x128xf32>
    %8 = vector.broadcast %2 : vector<1x32x1xf32> to vector<2x32x128xf32>
    %9 = arith.addf %7, %8 : vector<2x32x128xf32>
    %cst = arith.constant 0.000000e+00 : f32
    %10 = vector.broadcast %cst : f32 to vector<2x32x128xf32>
    %11 = arith.maximumf %9, %10 : vector<2x32x128xf32>
    %c0_5 = arith.constant 0 : index
    %c0_6 = arith.constant 0 : index
    %c0_7 = arith.constant 0 : index
    %12 = vector.load %arg1[%c0_5, %c0_6, %c0_7] : memref<2x32x128xf32, #tpu.memory_space<vmem>>, vector<2x32x128xf32>
    %13 = vector.broadcast %3 : vector<1x32x1xf32> to vector<2x32x128xf32>
    %14 = arith.mulf %13, %11 : vector<2x32x128xf32>
    %15 = arith.addf %12, %14 : vector<2x32x128xf32>
    %16 = vector.broadcast %4 : vector<1x32x1xf32> to vector<2x32x128xf32>
    %17 = arith.addf %15, %16 : vector<2x32x128xf32>
    %c0_8 = arith.constant 0 : index
    %c0_9 = arith.constant 0 : index
    %c0_10 = arith.constant 0 : index
    %18 = vector.load %arg4[%c0_8, %c0_9, %c0_10] : memref<2x32x128xf32, #tpu.memory_space<vmem>>, vector<2x32x128xf32>
    tpu.vector_store %arg4[%c0_8, %c0_9, %c0_10], %17 {strides = array<i32>} : memref<2x32x128xf32, #tpu.memory_space<vmem>>, vector<2x32x128xf32>,
    return
  }
  func.func @transform_0(%arg0: i32) -> (i32, i32, i32) {
    %c0_i32 = arith.constant 0 : i32
    %c0_i32_0 = arith.constant 0 : i32
    %c0_i32_1 = arith.constant 0 : i32
    return %arg0, %c0_i32, %c0_i32_0 : i32, i32, i32
  }
  func.func @transform_1(%arg0: i32) -> (i32, i32, i32) {
    %c0_i32 = arith.constant 0 : i32
    %c0_i32_0 = arith.constant 0 : i32
    %c0_i32_1 = arith.constant 0 : i32
    return %arg0, %c0_i32, %c0_i32_0 : i32, i32, i32
  }
  func.func @transform_2(%arg0: i32) -> (i32, i32, i32) {
    %c0_i32 = arith.constant 0 : i32
    %c0_i32_0 = arith.constant 0 : i32
    %c0_i32_1 = arith.constant 0 : i32
    %c0_i32_2 = arith.constant 0 : i32
    return %c0_i32, %c0_i32_0, %c0_i32_1 : i32, i32, i32
  }
  func.func @transform_3(%arg0: i32) -> (i32, i32, i32) {
    %c0_i32 = arith.constant 0 : i32
    %c0_i32_0 = arith.constant 0 : i32
    %c0_i32_1 = arith.constant 0 : i32
    return %arg0, %c0_i32, %c0_i32_0 : i32, i32, i32
  }
}

</mosaic_0001>

<llo_original>
// kernel: point_sac_forward.2
$region0: #{point_sac_forward.2}
  #allocation0 [shape = 'u32[]', space=smem, size = 0x4, offset = 0x4, fixed_abs, tag = 'smem constant byte address 0x4 - core index']
  #allocation1 [shape = 'u32[144,128]{1,0:T(1,128)}', space=vmem, size = 0x12000, scoped, tag = 'internal scratch']
  %s0 = inlined_call_operand.vmem [shape: f32[2,32,128], index: 0, kind: input, shape index: {}]
  %s1 = inlined_call_operand.vmem [shape: bf16[32,32], index: 1, kind: input, shape index: {}]
  %s2 = inlined_call_operand.vmem [shape: f32[32,1], index: 2, kind: input, shape index: {}]
  %s3 = inlined_call_operand.vmem [shape: bf16[32,32], index: 3, kind: input, shape index: {}]
  %s4 = inlined_call_operand.vmem [shape: f32[32,1], index: 4, kind: input, shape index: {}]
  %s5 = inlined_call_operand.hbm [shape: f32[2,32,128], index: 5, kind: output, shape index: {0}]
  %s6 = inlined_call_operand.vmem [shape: f32[1,32,2], index: 6, kind: output, shape index: {1}]
  %7 = xla_tuple %s5, %s6
  %s8 = sld [smem:[#allocation0]]
  $region38: #{point_sac_forward.2} parent=0
    _
  %s10 = ssub.s32 1, %s8
  %s11 = scalar_select 0, %s10, %s8
  $region1: #{point_sac_forward.2} parent=0
    #allocation2 [shape = 'u8[32768]{0}', space=vmem, size = 0x8000, scoped, tag = 'output window, operand 0, single buffered']
    #allocation3 [shape = 's32[1]{0}', space=sflag, size = 0x4, scoped, tag = 'scoped memory for point_sac_forward.2']
    %12 = vsyncpa [#allocation3], 0
    // Predicated region
    $region2: #{point_sac_forward.2} parent=1 // pred_check
      _
    $region3: #{point_sac_forward.2} parent=1 // pred_check_branch
      %14 = sbr.rel (0) target = $region5
    $region4: #{point_sac_forward.2} parent=1 // pred_region
      _
    $region5: #{point_sac_forward.2} parent=1 // pred_fallthru
      _
    // Predicated region
    $region6: #{point_sac_forward.2} parent=1 // pred_check
      _
    $region7: #{point_sac_forward.2} parent=1 // pred_check_branch
      %16 = sbr.rel (0) target = $region9
    $region8: #{point_sac_forward.2} parent=1 // pred_region
      _
    $region9: #{point_sac_forward.2} parent=1 // pred_fallthru
      _
    // Predicated region
    $region10: #{point_sac_forward.2} parent=1 // pred_check
      _
    $region11: #{point_sac_forward.2} parent=1 // pred_check_branch
      %18 = sbr.rel (0) target = $region13
    $region12: #{point_sac_forward.2} parent=1 // pred_region
      _
    $region13: #{point_sac_forward.2} parent=1 // pred_fallthru
      _
    // Predicated region
    $region14: #{point_sac_forward.2} parent=1 // pred_check
      _
    $region15: #{point_sac_forward.2} parent=1 // pred_check_branch
      %20 = sbr.rel (0) target = $region17
    $region16: #{point_sac_forward.2} parent=1 // pred_region
      _
    $region17: #{point_sac_forward.2} parent=1 // pred_fallthru
      _
    // Predicated region
    $region18: #{point_sac_forward.2} parent=1 // pred_check
      _
    $region19: #{point_sac_forward.2} parent=1 // pred_check_branch
      %22 = sbr.rel (0) target = $region21
    $region20: #{point_sac_forward.2} parent=1 // pred_region
      _
    $region21: #{point_sac_forward.2} parent=1 // pred_fallthru
      _
    %v24 = vld [vmem:[%s1] sm:$0xf]
    %v25 = vld [vmem:[%s1 + $0x4] sm:$0xf]
    %v26 = vld [vmem:[%s1 + $0x8] sm:$0xf]
    %v27 = vld [vmem:[%s1 + $0xc] sm:$0xf]
    %v28 = vld [vmem:[%s3] sm:$0xf]
    %v29 = vld [vmem:[%s3 + $0x4] sm:$0xf]
    %v30 = vld [vmem:[%s3 + $0x8] sm:$0xf]
    %v31 = vld [vmem:[%s3 + $0xc] sm:$0xf]
    %v32 = vld [vmem:[%s2] sm:$0xff]
    %v33 = vld [vmem:[%s2 + $0x8] sm:$0xff]
    %v34 = vld [vmem:[%s2 + $0x10] sm:$0xff]
    %v35 = vld [vmem:[%s2 + $0x18] sm:$0xff]
    %v36 = vld [vmem:[%s4] sm:$0xff]
    %v37 = vld [vmem:[%s4 + $0x8] sm:$0xff]
    %v38 = vld [vmem:[%s4 + $0x10] sm:$0xff]
    %v39 = vld [vmem:[%s4 + $0x18] sm:$0xff]
    %v40 = vld [vmem:[%s0] sm:$0xff]
    %v41 = vld [vmem:[%s0 + $0x8] sm:$0xff]
    %v42 = vld [vmem:[%s0 + $0x10] sm:$0xff]
    %v43 = vld [vmem:[%s0 + $0x18] sm:$0xff]
    %v44 = vpack.c.bf16 %v41, %v40
    %v45 = vpack.c.bf16 %v43, %v42
    %47 = vset.pattern.permute.xlu0 0
    %48 = vperm.xlu0 %47, %v32
    %v49 = vpop.permute.xlu0 %48
    %52 = vset.pattern.permute.xlu0 0
    %53 = vperm.xlu0 %52, %v33
    %v54 = vpop.permute.xlu0 %53
    %57 = vset.pattern.permute.xlu0 0
    %58 = vperm.xlu0 %57, %v34
    %v59 = vpop.permute.xlu0 %58
    %62 = vset.pattern.permute.xlu0 0
    %63 = vperm.xlu0 %62, %v35
    %v64 = vpop.permute.xlu0 %63
    %v70 = vunpack.c.l.b16 %v24
    %v71 = vunpack.c.l.b16 %v25
    %v72 = vunpack.c.l.b16 %v26
    %v73 = vunpack.c.l.b16 %v27
    %v74 = vpack.c.b16 %v71, %v70
    %v75 = vpack.c.b16 %v73, %v72
    %vm76 = vcmask 261120
    %v78 = vsel %vm76, %v74, 0
    %v81 = vsel %vm76, %v75, 0
    %83 = vmatprep.subr.bf16.mxu0 0
    %84 = vmatpush1.bf16.msra.mxu0 %v44
    %85 = vmatprep.subr.bf16.mxu0 0
    %86 = vmatpush1.bf16.msra.mxu0 %v45
    %87 = vmatprep.subr.bf16.mxu0 0
    %88 = vmatpush1.bf16.msra.mxu0 0
    %89 = vmatprep.subr.bf16.mxu0 0
    %90 = vmatpush1.bf16.msra.mxu0 0
    %91 = vmatprep.subr.bf16.mxu0 0
    %92 = vmatpush1.bf16.msra.mxu0 0
    %93 = vmatprep.subr.bf16.mxu0 0
    %94 = vmatpush1.bf16.msra.mxu0 0
    %95 = vmatprep.subr.bf16.mxu0 0
    %96 = vmatpush1.bf16.msra.mxu0 0
    %97 = vmatprep.subr.bf16.mxu0 0
    %98 = vmatpush1.bf16.msra.mxu0 0
    %99 = vmatprep.subr.bf16.mxu0 0
    %100 = vmatpush1.bf16.msra.mxu0 0
    %101 = vmatprep.subr.bf16.mxu0 0
    %102 = vmatpush1.bf16.msra.mxu0 0
    %103 = vmatprep.subr.bf16.mxu0 0
    %104 = vmatpush1.bf16.msra.mxu0 0
    %105 = vmatprep.subr.bf16.mxu0 0
    %106 = vmatpush1.bf16.msra.mxu0 0
    %107 = vmatprep.subr.bf16.mxu0 0
    %108 = vmatpush1.bf16.msra.mxu0 0
    %109 = vmatprep.subr.bf16.mxu0 0
    %110 = vmatpush1.bf16.msra.mxu0 0
    %111 = vmatprep.subr.bf16.mxu0 0
    %112 = vmatpush1.bf16.msra.mxu0 0
    %113 = vmatprep.subr.bf16.mxu0 0
    %114 = vmatpush1.bf16.msra.mxu0 0
    %115 = vmatprep.mubr.bf16.mxu0 0
    %116 = vmatmul.mubr.bf16.gmra.mrb[0].mxu0 %v78
    %v117 = vpop.f32.mrb[0].mxu0
    %v118 = vadd.f32 %v49, %v117
    %v119 = vpop.f32.mrb[0].mxu0
    %v120 = vpop.f32.mrb[0].mxu0
    %v121 = vadd.f32 %v54, %v120
    %v122 = vpop.f32.mrb[0].mxu0
    %123 = vmatprep.mubr.bf16.mxu0 0
    %124 = vmatmul.mubr.bf16.gmra.mrb[0].mxu0 %v81
    %v125 = vpop.f32.mrb[0].mxu0
    %v126 = vadd.f32 %v59, %v125
    %v127 = vpop.f32.mrb[0].mxu0
    %v128 = vpop.f32.mrb[0].mxu0
    %v129 = vadd.f32 %v64, %v128
    %v130 = vpop.f32.mrb[0].mxu0
    %131 = vdwg.mxu0
    %v132 = vpack.c.bf16 %v121, %v118
    %v133 = vpack.c.bf16 %v129, %v126
    %134 = vxpose.xlu0.c.b16.start [1/8] %v44, 128
    %135 = vxpose.xlu0.c.b16.cont [2/8] %v45, 128
    %136 = vxpose.xlu0.c.b16.cont [3/8] 0, 128
    %137 = vxpose.xlu0.c.b16.cont [4/8] 0, 128
    %138 = vxpose.xlu0.c.b16.cont [5/8] 0, 128
    %139 = vxpose.xlu0.c.b16.cont [6/8] 0, 128
    %140 = vxpose.xlu0.c.b16.cont [7/8] 0, 128
    %141 = vxpose.xlu0.c.b16.end [8/8] 0, 128
    %v142 = vpop.trf.xlu0
    %v143 = vpop.trf.xlu0
    %v144 = vpop.trf.xlu0
    %v145 = vpop.trf.xlu0
    %v146 = vpop.trf.xlu0
    %v147 = vpop.trf.xlu0
    %v148 = vpop.trf.xlu0
    %v149 = vpop.trf.xlu0
    %v151 = vsel %vm76, %v142, 0
    %v154 = vsel %vm76, %v143, 0
    %v157 = vsel %vm76, %v144, 0
    %v160 = vsel %vm76, %v145, 0
    %v163 = vsel %vm76, %v146, 0
    %v166 = vsel %vm76, %v147, 0
    %v169 = vsel %vm76, %v148, 0
    %v172 = vsel %vm76, %v149, 0
    %174 = vmatprep.subr.bf16.mxu0 0
    %175 = vmatpush1.bf16.msra.mxu0 %v132
    %176 = vmatprep.subr.bf16.mxu0 0
    %177 = vmatpush1.bf16.msra.mxu0 %v133
    %178 = vmatprep.subr.bf16.mxu0 0
    %179 = vmatpush1.bf16.msra.mxu0 0
    %180 = vmatprep.subr.bf16.mxu0 0
    %181 = vmatpush1.bf16.msra.mxu0 0
    %182 = vmatprep.subr.bf16.mxu0 0
    %183 = vmatpush1.bf16.msra.mxu0 0
    %184 = vmatprep.subr.bf16.mxu0 0
    %185 = vmatpush1.bf16.msra.mxu0 0
    %186 = vmatprep.subr.bf16.mxu0 0
    %187 = vmatpush1.bf16.msra.mxu0 0
    %188 = vmatprep.subr.bf16.mxu0 0
    %189 = vmatpush1.bf16.msra.mxu0 0
    %190 = vmatprep.subr.bf16.mxu0 0
    %191 = vmatpush1.bf16.msra.mxu0 0
    %192 = vmatprep.subr.bf16.mxu0 0
    %193 = vmatpush1.bf16.msra.mxu0 0
    %194 = vmatprep.subr.bf16.mxu0 0
    %195 = vmatpush1.bf16.msra.mxu0 0
    %196 = vmatprep.subr.bf16.mxu0 0
    %197 = vmatpush1.bf16.msra.mxu0 0
    %198 = vmatprep.subr.bf16.mxu0 0
    %199 = vmatpush1.bf16.msra.mxu0 0
    %200 = vmatprep.subr.bf16.mxu0 0
    %201 = vmatpush1.bf16.msra.mxu0 0
    %202 = vmatprep.subr.bf16.mxu0 0
    %203 = vmatpush1.bf16.msra.mxu0 0
    %204 = vmatprep.subr.bf16.mxu0 0
    %205 = vmatpush1.bf16.msra.mxu0 0
    %206 = vmatprep.mubr.bf16.mxu0 0
    %207 = vmatmul.mubr.bf16.gmra.mrb[0].mxu0 %v151
    %v208 = vpop.f32.mrb[0].mxu0
    %v209 = vadd.f32 0.0, %v208
    %v210 = vpop.f32.mrb[0].mxu0
    %v211 = vpop.f32.mrb[0].mxu0
    %v212 = vadd.f32 0.0, %v211
    %v213 = vpop.f32.mrb[0].mxu0
    %214 = vmatprep.mubr.bf16.mxu0 0
    %215 = vmatmul.mubr.bf16.gmra.mrb[0].mxu0 %v154
    %v216 = vpop.f32.mrb[0].mxu0
    %v217 = vadd.f32 0.0, %v216
    %v218 = vpop.f32.mrb[0].mxu0
    %v219 = vpop.f32.mrb[0].mxu0
    %v220 = vadd.f32 0.0, %v219
    %v221 = vpop.f32.mrb[0].mxu0
    %222 = vmatprep.mubr.bf16.mxu0 0
    %223 = vmatmul.mubr.bf16.gmra.mrb[0].mxu0 %v157
    %v224 = vpop.f32.mrb[0].mxu0
    %v225 = vadd.f32 0.0, %v224
    %v226 = vpop.f32.mrb[0].mxu0
    %v227 = vpop.f32.mrb[0].mxu0
    %v228 = vadd.f32 0.0, %v227
    %v229 = vpop.f32.mrb[0].mxu0
    %230 = vmatprep.mubr.bf16.mxu0 0
    %231 = vmatmul.mubr.bf16.gmra.mrb[0].mxu0 %v160
    %v232 = vpop.f32.mrb[0].mxu0
    %v233 = vadd.f32 0.0, %v232
    %v234 = vpop.f32.mrb[0].mxu0
    %v235 = vpop.f32.mrb[0].mxu0
    %v236 = vadd.f32 0.0, %v235
    %v237 = vpop.f32.mrb[0].mxu0
    %238 = vmatprep.mubr.bf16.mxu0 0
    %239 = vmatmul.mubr.bf16.gmra.mrb[0].mxu0 %v163
    %v240 = vpop.f32.mrb[0].mxu0
    %v241 = vadd.f32 0.0, %v240
    %v242 = vpop.f32.mrb[0].mxu0
    %v243 = vpop.f32.mrb[0].mxu0
    %v244 = vadd.f32 0.0, %v243
    %v245 = vpop.f32.mrb[0].mxu0
    %246 = vmatprep.mubr.bf16.mxu0 0
    %247 = vmatmul.mubr.bf16.gmra.mrb[0].mxu0 %v166
    %v248 = vpop.f32.mrb[0].mxu0
    %v249 = vadd.f32 0.0, %v248
    %v250 = vpop.f32.mrb[0].mxu0
    %v251 = vpop.f32.mrb[0].mxu0
    %v252 = vadd.f32 0.0, %v251
    %v253 = vpop.f32.mrb[0].mxu0
    %254 = vmatprep.mubr.bf16.mxu0 0
    %255 = vmatmul.mubr.bf16.gmra.mrb[0].mxu0 %v169
    %v256 = vpop.f32.mrb[0].mxu0
    %v257 = vadd.f32 0.0, %v256
    %v258 = vpop.f32.mrb[0].mxu0
    %v259 = vpop.f32.mrb[0].mxu0
    %v260 = vadd.f32 0.0, %v259
    %v261 = vpop.f32.mrb[0].mxu0
    %262 = vmatprep.mubr.bf16.mxu0 0
    %263 = vmatmul.mubr.bf16.gmra.mrb[0].mxu0 %v172
    %v264 = vpop.f32.mrb[0].mxu0
    %v265 = vadd.f32 0.0, %v264
    %v266 = vpop.f32.mrb[0].mxu0
    %v267 = vpop.f32.mrb[0].mxu0
    %v268 = vadd.f32 0.0, %v267
    %v269 = vpop.f32.mrb[0].mxu0
    %270 = vdwg.mxu0
    %271 = vmax.xlane.f32.xlu0 %v209
    %v272 = vpop.xlane.xlu0 %271
    %273 = vmax.xlane.f32.xlu0 %v212
    %v274 = vpop.xlane.xlu0 %273
    %275 = vmax.xlane.f32.xlu0 %v217
    %v276 = vpop.xlane.xlu0 %275
    %277 = vmax.xlane.f32.xlu0 %v220
    %v278 = vpop.xlane.xlu0 %277
    %279 = vmax.xlane.f32.xlu0 %v225
    %v280 = vpop.xlane.xlu0 %279
    %281 = vmax.xlane.f32.xlu0 %v228
    %v282 = vpop.xlane.xlu0 %281
    %283 = vmax.xlane.f32.xlu0 %v233
    %v284 = vpop.xlane.xlu0 %283
    %285 = vmax.xlane.f32.xlu0 %v236
    %v286 = vpop.xlane.xlu0 %285
    %287 = vmax.xlane.f32.xlu0 %v241
    %v288 = vpop.xlane.xlu0 %287
    %289 = vmax.xlane.f32.xlu0 %v244
    %v290 = vpop.xlane.xlu0 %289
    %291 = vmax.xlane.f32.xlu0 %v249
    %v292 = vpop.xlane.xlu0 %291
    %293 = vmax.xlane.f32.xlu0 %v252
    %v294 = vpop.xlane.xlu0 %293
    %295 = vmax.xlane.f32.xlu0 %v257
    %v296 = vpop.xlane.xlu0 %295
    %297 = vmax.xlane.f32.xlu0 %v260
    %v298 = vpop.xlane.xlu0 %297
    %299 = vmax.xlane.f32.xlu0 %v265
    %v300 = vpop.xlane.xlu0 %299
    %301 = vmax.xlane.f32.xlu0 %v268
    %v302 = vpop.xlane.xlu0 %301
    %v303 = vsub.f32 %v209, %v272
    %v304 = vsub.f32 %v212, %v274
    %v305 = vsub.f32 %v217, %v276
    %v306 = vsub.f32 %v220, %v278
    %v307 = vsub.f32 %v225, %v280
    %v308 = vsub.f32 %v228, %v282
    %v309 = vsub.f32 %v233, %v284
    %v310 = vsub.f32 %v236, %v286
    %v311 = vsub.f32 %v241, %v288
    %v312 = vsub.f32 %v244, %v290
    %v313 = vsub.f32 %v249, %v292
    %v314 = vsub.f32 %v252, %v294
    %v315 = vsub.f32 %v257, %v296
    %v316 = vsub.f32 %v260, %v298
    %v317 = vsub.f32 %v265, %v300
    %v318 = vsub.f32 %v268, %v302
    %v319 = vmul.f32 %v303, 1.442695
    %v320 = vpow.pop %v319
    %v321 = vmul.f32 %v304, 1.442695
    %v322 = vpow.pop %v321
    %v323 = vmul.f32 %v305, 1.442695
    %v324 = vpow.pop %v323
    %v325 = vmul.f32 %v306, 1.442695
    %v326 = vpow.pop %v325
    %v327 = vmul.f32 %v307, 1.442695
    %v328 = vpow.pop %v327
    %v329 = vmul.f32 %v308, 1.442695
    %v330 = vpow.pop %v329
    %v331 = vmul.f32 %v309, 1.442695
    %v332 = vpow.pop %v331
    %v333 = vmul.f32 %v310, 1.442695
    %v334 = vpow.pop %v333
    %v335 = vmul.f32 %v311, 1.442695
    %v336 = vpow.pop %v335
    %v337 = vmul.f32 %v312, 1.442695
    %v338 = vpow.pop %v337
    %v339 = vmul.f32 %v313, 1.442695
    %v340 = vpow.pop %v339
    %v341 = vmul.f32 %v314, 1.442695
    %v342 = vpow.pop %v341
    %v343 = vmul.f32 %v315, 1.442695
    %v344 = vpow.pop %v343
    %v345 = vmul.f32 %v316, 1.442695
    %v346 = vpow.pop %v345
    %v347 = vmul.f32 %v317, 1.442695
    %v348 = vpow.pop %v347
    %v349 = vmul.f32 %v318, 1.442695
    %v350 = vpow.pop %v349
    %351 = vadd.xlane.f32.xlu0 %v320
    %v352 = vpop.xlane.xlu0 %351
    %353 = vadd.xlane.f32.xlu0 %v322
    %v354 = vpop.xlane.xlu0 %353
    %355 = vadd.xlane.f32.xlu0 %v324
    %v356 = vpop.xlane.xlu0 %355
    %357 = vadd.xlane.f32.xlu0 %v326
    %v358 = vpop.xlane.xlu0 %357
    %359 = vadd.xlane.f32.xlu0 %v328
    %v360 = vpop.xlane.xlu0 %359
    %361 = vadd.xlane.f32.xlu0 %v330
    %v362 = vpop.xlane.xlu0 %361
    %363 = vadd.xlane.f32.xlu0 %v332
    %v364 = vpop.xlane.xlu0 %363
    %365 = vadd.xlane.f32.xlu0 %v334
    %v366 = vpop.xlane.xlu0 %365
    %367 = vadd.xlane.f32.xlu0 %v336
    %v368 = vpop.xlane.xlu0 %367
    %369 = vadd.xlane.f32.xlu0 %v338
    %v370 = vpop.xlane.xlu0 %369
    %371 = vadd.xlane.f32.xlu0 %v340
    %v372 = vpop.xlane.xlu0 %371
    %373 = vadd.xlane.f32.xlu0 %v342
    %v374 = vpop.xlane.xlu0 %373
    %375 = vadd.xlane.f32.xlu0 %v344
    %v376 = vpop.xlane.xlu0 %375
    %377 = vadd.xlane.f32.xlu0 %v346
    %v378 = vpop.xlane.xlu0 %377
    %379 = vadd.xlane.f32.xlu0 %v348
    %v380 = vpop.xlane.xlu0 %379
    %381 = vadd.xlane.f32.xlu0 %v350
    %v382 = vpop.xlane.xlu0 %381
    %v383 = vrcp.pop %v352
    %v384 = vrcp.pop %v354
    %v385 = vrcp.pop %v356
    %v386 = vrcp.pop %v358
    %v387 = vrcp.pop %v360
    %v388 = vrcp.pop %v362
    %v389 = vrcp.pop %v364
    %v390 = vrcp.pop %v366
    %v391 = vrcp.pop %v368
    %v392 = vrcp.pop %v370
    %v393 = vrcp.pop %v372
    %v394 = vrcp.pop %v374
    %v395 = vrcp.pop %v376
    %v396 = vrcp.pop %v378
    %v397 = vrcp.pop %v380
    %v398 = vrcp.pop %v382
    %399 = vxpose.xlu0.b32.start [1/16] %v383, 128
    %400 = vxpose.xlu0.b32.cont [2/16] %v384, 128
    %401 = vxpose.xlu0.b32.cont [3/16] %v385, 128
    %402 = vxpose.xlu0.b32.cont [4/16] %v386, 128
    %403 = vxpose.xlu0.b32.cont [5/16] %v387, 128
    %404 = vxpose.xlu0.b32.cont [6/16] %v388, 128
    %405 = vxpose.xlu0.b32.cont [7/16] %v389, 128
    %406 = vxpose.xlu0.b32.cont [8/16] %v390, 128
    %407 = vxpose.xlu0.b32.cont [9/16] %v391, 128
    %408 = vxpose.xlu0.b32.cont [10/16] %v392, 128
    %409 = vxpose.xlu0.b32.cont [11/16] %v393, 128
    %410 = vxpose.xlu0.b32.cont [12/16] %v394, 128
    %411 = vxpose.xlu0.b32.cont [13/16] %v395, 128
    %412 = vxpose.xlu0.b32.cont [14/16] %v396, 128
    %413 = vxpose.xlu0.b32.cont [15/16] %v397, 128
    %414 = vxpose.xlu0.b32.end [16/16] %v398, 128
    %v415 = vpop.trf.xlu0
    %v416 = vpop.trf.xlu0
    %v417 = vpop.trf.xlu0
    %v418 = vpop.trf.xlu0
    %v419 = vpop.trf.xlu0
    %v420 = vpop.trf.xlu0
    %v421 = vpop.trf.xlu0
    %v422 = vpop.trf.xlu0
    %v423 = vpop.trf.xlu0
    %v424 = vpop.trf.xlu0
    %v425 = vpop.trf.xlu0
    %v426 = vpop.trf.xlu0
    %v427 = vpop.trf.xlu0
    %v428 = vpop.trf.xlu0
    %v429 = vpop.trf.xlu0
    %v430 = vpop.trf.xlu0
    %v431 = vpack.c.bf16 %v322, %v320
    %v432 = vpack.c.bf16 %v326, %v324
    %v433 = vpack.c.bf16 %v330, %v328
    %v434 = vpack.c.bf16 %v334, %v332
    %v435 = vpack.c.bf16 %v338, %v336
    %v436 = vpack.c.bf16 %v342, %v340
    %v437 = vpack.c.bf16 %v346, %v344
    %v438 = vpack.c.bf16 %v350, %v348
    %v439 = vpack.c.bf16 %v415, %v415
    %440 = vmatprep.subr.bf16.mxu0 0
    %441 = vmatpush1.bf16.msra.mxu0 %v431
    %442 = vmatprep.subr.bf16.mxu0 0
    %443 = vmatpush1.bf16.msra.mxu0 %v432
    %444 = vmatprep.subr.bf16.mxu0 0
    %445 = vmatpush1.bf16.msra.mxu0 %v433
    %446 = vmatprep.subr.bf16.mxu0 0
    %447 = vmatpush1.bf16.msra.mxu0 %v434
    %448 = vmatprep.subr.bf16.mxu0 0
    %449 = vmatpush1.bf16.msra.mxu0 %v435
    %450 = vmatprep.subr.bf16.mxu0 0
    %451 = vmatpush1.bf16.msra.mxu0 %v436
    %452 = vmatprep.subr.bf16.mxu0 0
    %453 = vmatpush1.bf16.msra.mxu0 %v437
    %454 = vmatprep.subr.bf16.mxu0 0
    %455 = vmatpush1.bf16.msra.mxu0 %v438
    %456 = vmatprep.subr.bf16.mxu0 0
    %457 = vmatpush1.bf16.msra.mxu0 0
    %458 = vmatprep.subr.bf16.mxu0 0
    %459 = vmatpush1.bf16.msra.mxu0 0
    %460 = vmatprep.subr.bf16.mxu0 0
    %461 = vmatpush1.bf16.msra.mxu0 0
    %462 = vmatprep.subr.bf16.mxu0 0
    %463 = vmatpush1.bf16.msra.mxu0 0
    %464 = vmatprep.subr.bf16.mxu0 0
    %465 = vmatpush1.bf16.msra.mxu0 0
    %466 = vmatprep.subr.bf16.mxu0 0
    %467 = vmatpush1.bf16.msra.mxu0 0
    %468 = vmatprep.subr.bf16.mxu0 0
    %469 = vmatpush1.bf16.msra.mxu0 0
    %470 = vmatprep.subr.bf16.mxu0 0
    %471 = vmatpush1.bf16.msra.mxu0 0
    %472 = vmatprep.mubr.bf16.mxu0 0
    %473 = vmatmul.mubr.bf16.gmra.mrb[0].mxu0 %v439
    %v474 = vpop.f32.mrb[0].mxu0
    %v475 = vadd.f32 1e-09, %v474
    %v476 = vpop.f32.mrb[0].mxu0
    %v477 = vpop.f32.mrb[0].mxu0
    %v478 = vpop.f32.mrb[0].mxu0
    %479 = vdwg.mxu0
    %v480 = vrcp.pop %v475
    %v481 = vmul.f32 1.0, %v480
    %v482 = vlaneseq
    %v483 = vshrl.u32 %v482, 7
    %v484 = vsub.s32 0, %v483
    %v485 = vrot.slane %v415, %v484
    %v486 = vmul.f32 %v118, %v485
    %v487 = vmul.f32 %v121, %v485
    %v488 = vmul.f32 %v126, %v485
    %v489 = vmul.f32 %v129, %v485
    %v490 = vpack.c.bf16 %v487, %v486
    %v491 = vpack.c.bf16 %v489, %v488
    %492 = vmatprep.subr.bf16.mxu0 0
    %493 = vmatpush1.bf16.msra.mxu0 %v431
    %494 = vmatprep.subr.bf16.mxu0 0
    %495 = vmatpush1.bf16.msra.mxu0 %v432
    %496 = vmatprep.subr.bf16.mxu0 0
    %497 = vmatpush1.bf16.msra.mxu0 %v433
    %498 = vmatprep.subr.bf16.mxu0 0
    %499 = vmatpush1.bf16.msra.mxu0 %v434
    %500 = vmatprep.subr.bf16.mxu0 0
    %501 = vmatpush1.bf16.msra.mxu0 %v435
    %502 = vmatprep.subr.bf16.mxu0 0
    %503 = vmatpush1.bf16.msra.mxu0 %v436
    %504 = vmatprep.subr.bf16.mxu0 0
    %505 = vmatpush1.bf16.msra.mxu0 %v437
    %506 = vmatprep.subr.bf16.mxu0 0
    %507 = vmatpush1.bf16.msra.mxu0 %v438
    %508 = vmatprep.subr.bf16.mxu0 0
    %509 = vmatpush1.bf16.msra.mxu0 0
    %510 = vmatprep.subr.bf16.mxu0 0
    %511 = vmatpush1.bf16.msra.mxu0 0
    %512 = vmatprep.subr.bf16.mxu0 0
    %513 = vmatpush1.bf16.msra.mxu0 0
    %514 = vmatprep.subr.bf16.mxu0 0
    %515 = vmatpush1.bf16.msra.mxu0 0
    %516 = vmatprep.subr.bf16.mxu0 0
    %517 = vmatpush1.bf16.msra.mxu0 0
    %518 = vmatprep.subr.bf16.mxu0 0
    %519 = vmatpush1.bf16.msra.mxu0 0
    %520 = vmatprep.subr.bf16.mxu0 0
    %521 = vmatpush1.bf16.msra.mxu0 0
    %522 = vmatprep.subr.bf16.mxu0 0
    %523 = vmatpush1.bf16.msra.mxu0 0
    %524 = vmatprep.mubr.bf16.mxu0 0
    %525 = vmatmul.mubr.bf16.gmra.mrb[0].mxu0 %v490
    %v526 = vpop.f32.mrb[0].mxu0
    %v527 = vadd.f32 0.0, %v526
    %v528 = vpop.f32.mrb[0].mxu0
    %v529 = vpop.f32.mrb[0].mxu0
    %v530 = vadd.f32 0.0, %v529
    %v531 = vpop.f32.mrb[0].mxu0
    %532 = vmatprep.mubr.bf16.mxu0 0
    %533 = vmatmul.mubr.bf16.gmra.mrb[0].mxu0 %v491
    %v534 = vpop.f32.mrb[0].mxu0
    %v535 = vadd.f32 0.0, %v534
    %v536 = vpop.f32.mrb[0].mxu0
    %v537 = vpop.f32.mrb[0].mxu0
    %v538 = vadd.f32 0.0, %v537
    %v539 = vpop.f32.mrb[0].mxu0
    %540 = vdwg.mxu0
    %v541 = vlaneseq
    %v542 = vshrl.u32 %v541, 7
    %v543 = vsub.s32 0, %v542
    %v544 = vrot.slane %v481, %v543
    %v545 = vmul.f32 %v527, %v544
    %v546 = vmul.f32 %v530, %v544
    %v547 = vmul.f32 %v535, %v544
    %v548 = vmul.f32 %v538, %v544
    %v549 = vsub.f32 %v40, %v545
    %v550 = vsub.f32 %v41, %v546
    %v551 = vsub.f32 %v42, %v547
    %v552 = vsub.f32 %v43, %v548
    %v553 = vpack.c.bf16 %v550, %v549
    %v554 = vpack.c.bf16 %v552, %v551
    %556 = vset.pattern.permute.xlu0 0
    %557 = vperm.xlu0 %556, %v36
    %v558 = vpop.permute.xlu0 %557
    %561 = vset.pattern.permute.xlu0 0
    %562 = vperm.xlu0 %561, %v37
    %v563 = vpop.permute.xlu0 %562
    %566 = vset.pattern.permute.xlu0 0
    %567 = vperm.xlu0 %566, %v38
    %v568 = vpop.permute.xlu0 %567
    %571 = vset.pattern.permute.xlu0 0
    %572 = vperm.xlu0 %571, %v39
    %v573 = vpop.permute.xlu0 %572
    %v579 = vunpack.c.l.b16 %v28
    %v580 = vunpack.c.l.b16 %v29
    %v581 = vunpack.c.l.b16 %v30
    %v582 = vunpack.c.l.b16 %v31
    %v583 = vpack.c.b16 %v580, %v579
    %v584 = vpack.c.b16 %v582, %v581
    %v586 = vsel %vm76, %v583, 0
    %v589 = vsel %vm76, %v584, 0
    %591 = vmatprep.subr.bf16.mxu0 0
    %592 = vmatpush1.bf16.msra.mxu0 %v553
    %593 = vmatprep.subr.bf16.mxu0 0
    %594 = vmatpush1.bf16.msra.mxu0 %v554
    %595 = vmatprep.subr.bf16.mxu0 0
    %596 = vmatpush1.bf16.msra.mxu0 0
    %597 = vmatprep.subr.bf16.mxu0 0
    %598 = vmatpush1.bf16.msra.mxu0 0
    %599 = vmatprep.subr.bf16.mxu0 0
    %600 = vmatpush1.bf16.msra.mxu0 0
    %601 = vmatprep.subr.bf16.mxu0 0
    %602 = vmatpush1.bf16.msra.mxu0 0
    %603 = vmatprep.subr.bf16.mxu0 0
    %604 = vmatpush1.bf16.msra.mxu0 0
    %605 = vmatprep.subr.bf16.mxu0 0
    %606 = vmatpush1.bf16.msra.mxu0 0
    %607 = vmatprep.subr.bf16.mxu0 0
    %608 = vmatpush1.bf16.msra.mxu0 0
    %609 = vmatprep.subr.bf16.mxu0 0
    %610 = vmatpush1.bf16.msra.mxu0 0
    %611 = vmatprep.subr.bf16.mxu0 0
    %612 = vmatpush1.bf16.msra.mxu0 0
    %613 = vmatprep.subr.bf16.mxu0 0
    %614 = vmatpush1.bf16.msra.mxu0 0
    %615 = vmatprep.subr.bf16.mxu0 0
    %616 = vmatpush1.bf16.msra.mxu0 0
    %617 = vmatprep.subr.bf16.mxu0 0
    %618 = vmatpush1.bf16.msra.mxu0 0
    %619 = vmatprep.subr.bf16.mxu0 0
    %620 = vmatpush1.bf16.msra.mxu0 0
    %621 = vmatprep.subr.bf16.mxu0 0
    %622 = vmatpush1.bf16.msra.mxu0 0
    %623 = vmatprep.mubr.bf16.mxu0 0
    %624 = vmatmul.mubr.bf16.gmra.mrb[0].mxu0 %v586
    %v625 = vpop.f32.mrb[0].mxu0
    %v626 = vadd.f32 %v558, %v625
    %v627 = vpop.f32.mrb[0].mxu0
    %v628 = vpop.f32.mrb[0].mxu0
    %v629 = vadd.f32 %v563, %v628
    %v630 = vpop.f32.mrb[0].mxu0
    %631 = vmatprep.mubr.bf16.mxu0 0
    %632 = vmatmul.mubr.bf16.gmra.mrb[0].mxu0 %v589
    %v633 = vpop.f32.mrb[0].mxu0
    %v634 = vadd.f32 %v568, %v633
    %v635 = vpop.f32.mrb[0].mxu0
    %v636 = vpop.f32.mrb[0].mxu0
    %v637 = vadd.f32 %v573, %v636
    %v638 = vpop.f32.mrb[0].mxu0
    %639 = vdwg.mxu0
    %640 = vst [vmem:[#allocation2] sm:$0xff] %v626
    %641 = vst [vmem:[#allocation2 + $0x8] sm:$0xff] %v629
    %642 = vst [vmem:[#allocation2 + $0x10] sm:$0xff] %v634
    %643 = vst [vmem:[#allocation2 + $0x18] sm:$0xff] %v637
    %644 = vadd.xlane.f32.xlu0 %v626
    %v645 = vpop.xlane.xlu0 %644
    %646 = vadd.xlane.f32.xlu0 %v629
    %v647 = vpop.xlane.xlu0 %646
    %648 = vadd.xlane.f32.xlu0 %v634
    %v649 = vpop.xlane.xlu0 %648
    %650 = vadd.xlane.f32.xlu0 %v637
    %v651 = vpop.xlane.xlu0 %650
    %v652 = vadd.f32 %v645, 0.0
    %v653 = vadd.f32 %v647, 0.0
    %v654 = vadd.f32 %v649, 0.0
    %v655 = vadd.f32 %v651, 0.0
    %v656 = vmul.f32 %v626, %v626
    %v657 = vmul.f32 %v629, %v629
    %v658 = vmul.f32 %v634, %v634
    %v659 = vmul.f32 %v637, %v637
    %660 = vadd.xlane.f32.xlu0 %v656
    %v661 = vpop.xlane.xlu0 %660
    %662 = vadd.xlane.f32.xlu0 %v657
    %v663 = vpop.xlane.xlu0 %662
    %664 = vadd.xlane.f32.xlu0 %v658
    %v665 = vpop.xlane.xlu0 %664
    %666 = vadd.xlane.f32.xlu0 %v659
    %v667 = vpop.xlane.xlu0 %666
    %v668 = vadd.f32 %v661, 0.0
    %v669 = vadd.f32 %v663, 0.0
    %v670 = vadd.f32 %v665, 0.0
    %v671 = vadd.f32 %v667, 0.0
    %s672 = scalar_lea.vmem %s0, 32
    %v673 = vld [vmem:[%s672] sm:$0xff]
    %v674 = vld [vmem:[%s672 + $0x8] sm:$0xff]
    %v675 = vld [vmem:[%s672 + $0x10] sm:$0xff]
    %v676 = vld [vmem:[%s672 + $0x18] sm:$0xff]
    %v677 = vpack.c.bf16 %v674, %v673
    %v678 = vpack.c.bf16 %v676, %v675
    %679 = vmatprep.subr.bf16.mxu0 0
    %680 = vmatpush1.bf16.msra.mxu0 %v677
    %681 = vmatprep.subr.bf16.mxu0 0
    %682 = vmatpush1.bf16.msra.mxu0 %v678
    %683 = vmatprep.subr.bf16.mxu0 0
    %684 = vmatpush1.bf16.msra.mxu0 0
    %685 = vmatprep.subr.bf16.mxu0 0
    %686 = vmatpush1.bf16.msra.mxu0 0
    %687 = vmatprep.subr.bf16.mxu0 0
    %688 = vmatpush1.bf16.msra.mxu0 0
    %689 = vmatprep.subr.bf16.mxu0 0
    %690 = vmatpush1.bf16.msra.mxu0 0
    %691 = vmatprep.subr.bf16.mxu0 0
    %692 = vmatpush1.bf16.msra.mxu0 0
    %693 = vmatprep.subr.bf16.mxu0 0
    %694 = vmatpush1.bf16.msra.mxu0 0
    %695 = vmatprep.subr.bf16.mxu0 0
    %696 = vmatpush1.bf16.msra.mxu0 0
    %697 = vmatprep.subr.bf16.mxu0 0
    %698 = vmatpush1.bf16.msra.mxu0 0
    %699 = vmatprep.subr.bf16.mxu0 0
    %700 = vmatpush1.bf16.msra.mxu0 0
    %701 = vmatprep.subr.bf16.mxu0 0
    %702 = vmatpush1.bf16.msra.mxu0 0
    %703 = vmatprep.subr.bf16.mxu0 0
    %704 = vmatpush1.bf16.msra.mxu0 0
    %705 = vmatprep.subr.bf16.mxu0 0
    %706 = vmatpush1.bf16.msra.mxu0 0
    %707 = vmatprep.subr.bf16.mxu0 0
    %708 = vmatpush1.bf16.msra.mxu0 0
    %709 = vmatprep.subr.bf16.mxu0 0
    %710 = vmatpush1.bf16.msra.mxu0 0
    %711 = vmatprep.mubr.bf16.mxu0 0
    %712 = vmatmul.mubr.bf16.gmra.mrb[0].mxu0 %v78
    %v713 = vpop.f32.mrb[0].mxu0
    %v714 = vadd.f32 %v49, %v713
    %v715 = vpop.f32.mrb[0].mxu0
    %v716 = vpop.f32.mrb[0].mxu0
    %v717 = vadd.f32 %v54, %v716
    %v718 = vpop.f32.mrb[0].mxu0
    %719 = vmatprep.mubr.bf16.mxu0 0
    %720 = vmatmul.mubr.bf16.gmra.mrb[0].mxu0 %v81
    %v721 = vpop.f32.mrb[0].mxu0
    %v722 = vadd.f32 %v59, %v721
    %v723 = vpop.f32.mrb[0].mxu0
    %v724 = vpop.f32.mrb[0].mxu0
    %v725 = vadd.f32 %v64, %v724
    %v726 = vpop.f32.mrb[0].mxu0
    %727 = vdwg.mxu0
    %v728 = vpack.c.bf16 %v717, %v714
    %v729 = vpack.c.bf16 %v725, %v722
    %730 = vxpose.xlu0.c.b16.start [1/8] %v677, 128
    %731 = vxpose.xlu0.c.b16.cont [2/8] %v678, 128
    %732 = vxpose.xlu0.c.b16.cont [3/8] 0, 128
    %733 = vxpose.xlu0.c.b16.cont [4/8] 0, 128
    %734 = vxpose.xlu0.c.b16.cont [5/8] 0, 128
    %735 = vxpose.xlu0.c.b16.cont [6/8] 0, 128
    %736 = vxpose.xlu0.c.b16.cont [7/8] 0, 128
    %737 = vxpose.xlu0.c.b16.end [8/8] 0, 128
    %v738 = vpop.trf.xlu0
    %v739 = vpop.trf.xlu0
    %v740 = vpop.trf.xlu0
    %v741 = vpop.trf.xlu0
    %v742 = vpop.trf.xlu0
    %v743 = vpop.trf.xlu0
    %v744 = vpop.trf.xlu0
    %v745 = vpop.trf.xlu0
    %v747 = vsel %vm76, %v738, 0
    %v750 = vsel %vm76, %v739, 0
    %v753 = vsel %vm76, %v740, 0
    %v756 = vsel %vm76, %v741, 0
    %v759 = vsel %vm76, %v742, 0
    %v762 = vsel %vm76, %v743, 0
    %v765 = vsel %vm76, %v744, 0
    %v768 = vsel %vm76, %v745, 0
    %770 = vmatprep.subr.bf16.mxu0 0
    %771 = vmatpush1.bf16.msra.mxu0 %v728
    %772 = vmatprep.subr.bf16.mxu0 0
    %773 = vmatpush1.bf16.msra.mxu0 %v729
    %774 = vmatprep.subr.bf16.mxu0 0
    %775 = vmatpush1.bf16.msra.mxu0 0
    %776 = vmatprep.subr.bf16.mxu0 0
    %777 = vmatpush1.bf16.msra.mxu0 0
    %778 = vmatprep.subr.bf16.mxu0 0
    %779 = vmatpush1.bf16.msra.mxu0 0
    %780 = vmatprep.subr.bf16.mxu0 0
    %781 = vmatpush1.bf16.msra.mxu0 0
    %782 = vmatprep.subr.bf16.mxu0 0
    %783 = vmatpush1.bf16.msra.mxu0 0
    %784 = vmatprep.subr.bf16.mxu0 0
    %785 = vmatpush1.bf16.msra.mxu0 0
    %786 = vmatprep.subr.bf16.mxu0 0
    %787 = vmatpush1.bf16.msra.mxu0 0
    %788 = vmatprep.subr.bf16.mxu0 0
    %789 = vmatpush1.bf16.msra.mxu0 0
    %790 = vmatprep.subr.bf16.mxu0 0
    %791 = vmatpush1.bf16.msra.mxu0 0
    %792 = vmatprep.subr.bf16.mxu0 0
    %793 = vmatpush1.bf16.msra.mxu0 0
    %794 = vmatprep.subr.bf16.mxu0 0
    %795 = vmatpush1.bf16.msra.mxu0 0
    %796 = vmatprep.subr.bf16.mxu0 0
    %797 = vmatpush1.bf16.msra.mxu0 0
    %798 = vmatprep.subr.bf16.mxu0 0
    %799 = vmatpush1.bf16.msra.mxu0 0
    %800 = vmatprep.subr.bf16.mxu0 0
    %801 = vmatpush1.bf16.msra.mxu0 0
    %802 = vmatprep.mubr.bf16.mxu0 0
    %803 = vmatmul.mubr.bf16.gmra.mrb[0].mxu0 %v747
    %v804 = vpop.f32.mrb[0].mxu0
    %v805 = vadd.f32 0.0, %v804
    %v806 = vpop.f32.mrb[0].mxu0
    %v807 = vpop.f32.mrb[0].mxu0
    %v808 = vadd.f32 0.0, %v807
    %v809 = vpop.f32.mrb[0].mxu0
    %810 = vmatprep.mubr.bf16.mxu0 0
    %811 = vmatmul.mubr.bf16.gmra.mrb[0].mxu0 %v750
    %v812 = vpop.f32.mrb[0].mxu0
    %v813 = vadd.f32 0.0, %v812
    %v814 = vpop.f32.mrb[0].mxu0
    %v815 = vpop.f32.mrb[0].mxu0
    %v816 = vadd.f32 0.0, %v815
    %v817 = vpop.f32.mrb[0].mxu0
    %818 = vmatprep.mubr.bf16.mxu0 0
    %819 = vmatmul.mubr.bf16.gmra.mrb[0].mxu0 %v753
    %v820 = vpop.f32.mrb[0].mxu0
    %v821 = vadd.f32 0.0, %v820
    %v822 = vpop.f32.mrb[0].mxu0
    %v823 = vpop.f32.mrb[0].mxu0
    %v824 = vadd.f32 0.0, %v823
    %v825 = vpop.f32.mrb[0].mxu0
    %826 = vmatprep.mubr.bf16.mxu0 0
    %827 = vmatmul.mubr.bf16.gmra.mrb[0].mxu0 %v756
    %v828 = vpop.f32.mrb[0].mxu0
    %v829 = vadd.f32 0.0, %v828
    %v830 = vpop.f32.mrb[0].mxu0
    %v831 = vpop.f32.mrb[0].mxu0
    %v832 = vadd.f32 0.0, %v831
    %v833 = vpop.f32.mrb[0].mxu0
    %834 = vmatprep.mubr.bf16.mxu0 0
    %835 = vmatmul.mubr.bf16.gmra.mrb[0].mxu0 %v759
    %v836 = vpop.f32.mrb[0].mxu0
    %v837 = vadd.f32 0.0, %v836
    %v838 = vpop.f32.mrb[0].mxu0
    %v839 = vpop.f32.mrb[0].mxu0
    %v840 = vadd.f32 0.0, %v839
    %v841 = vpop.f32.mrb[0].mxu0
    %842 = vmatprep.mubr.bf16.mxu0 0
    %843 = vmatmul.mubr.bf16.gmra.mrb[0].mxu0 %v762
    %v844 = vpop.f32.mrb[0].mxu0
    %v845 = vadd.f32 0.0, %v844
    %v846 = vpop.f32.mrb[0].mxu0
    %v847 = vpop.f32.mrb[0].mxu0
    %v848 = vadd.f32 0.0, %v847
    %v849 = vpop.f32.mrb[0].mxu0
    %850 = vmatprep.mubr.bf16.mxu0 0
    %851 = vmatmul.mubr.bf16.gmra.mrb[0].mxu0 %v765
    %v852 = vpop.f32.mrb[0].mxu0
    %v853 = vadd.f32 0.0, %v852
    %v854 = vpop.f32.mrb[0].mxu0
    %v855 = vpop.f32.mrb[0].mxu0
    %v856 = vadd.f32 0.0, %v855
    %v857 = vpop.f32.mrb[0].mxu0
    %858 = vmatprep.mubr.bf16.mxu0 0
    %859 = vmatmul.mubr.bf16.gmra.mrb[0].mxu0 %v768
    %v860 = vpop.f32.mrb[0].mxu0
    %v861 = vadd.f32 0.0, %v860
    %v862 = vpop.f32.mrb[0].mxu0
    %v863 = vpop.f32.mrb[0].mxu0
    %v864 = vadd.f32 0.0, %v863
    %v865 = vpop.f32.mrb[0].mxu0
    %866 = vdwg.mxu0
    %867 = vmax.xlane.f32.xlu0 %v805
    %v868 = vpop.xlane.xlu0 %867
    %869 = vmax.xlane.f32.xlu0 %v808
    %v870 = vpop.xlane.xlu0 %869
    %871 = vmax.xlane.f32.xlu0 %v813
    %v872 = vpop.xlane.xlu0 %871
    %873 = vmax.xlane.f32.xlu0 %v816
    %v874 = vpop.xlane.xlu0 %873
    %875 = vmax.xlane.f32.xlu0 %v821
    %v876 = vpop.xlane.xlu0 %875
    %877 = vmax.xlane.f32.xlu0 %v824
    %v878 = vpop.xlane.xlu0 %877
    %879 = vmax.xlane.f32.xlu0 %v829
    %v880 = vpop.xlane.xlu0 %879
    %881 = vmax.xlane.f32.xlu0 %v832
    %v882 = vpop.xlane.xlu0 %881
    %883 = vmax.xlane.f32.xlu0 %v837
    %v884 = vpop.xlane.xlu0 %883
    %885 = vmax.xlane.f32.xlu0 %v840
    %v886 = vpop.xlane.xlu0 %885
    %887 = vmax.xlane.f32.xlu0 %v845
    %v888 = vpop.xlane.xlu0 %887
    %889 = vmax.xlane.f32.xlu0 %v848
    %v890 = vpop.xlane.xlu0 %889
    %891 = vmax.xlane.f32.xlu0 %v853
    %v892 = vpop.xlane.xlu0 %891
    %893 = vmax.xlane.f32.xlu0 %v856
    %v894 = vpop.xlane.xlu0 %893
    %895 = vmax.xlane.f32.xlu0 %v861
    %v896 = vpop.xlane.xlu0 %895
    %897 = vmax.xlane.f32.xlu0 %v864
    %v898 = vpop.xlane.xlu0 %897
    %v899 = vsub.f32 %v805, %v868
    %v900 = vsub.f32 %v808, %v870
    %v901 = vsub.f32 %v813, %v872
    %v902 = vsub.f32 %v816, %v874
    %v903 = vsub.f32 %v821, %v876
    %v904 = vsub.f32 %v824, %v878
    %v905 = vsub.f32 %v829, %v880
    %v906 = vsub.f32 %v832, %v882
    %v907 = vsub.f32 %v837, %v884
    %v908 = vsub.f32 %v840, %v886
    %v909 = vsub.f32 %v845, %v888
    %v910 = vsub.f32 %v848, %v890
    %v911 = vsub.f32 %v853, %v892
    %v912 = vsub.f32 %v856, %v894
    %v913 = vsub.f32 %v861, %v896
    %v914 = vsub.f32 %v864, %v898
    %v915 = vmul.f32 %v899, 1.442695
    %v916 = vpow.pop %v915
    %v917 = vmul.f32 %v900, 1.442695
    %v918 = vpow.pop %v917
    %v919 = vmul.f32 %v901, 1.442695
    %v920 = vpow.pop %v919
    %v921 = vmul.f32 %v902, 1.442695
    %v922 = vpow.pop %v921
    %v923 = vmul.f32 %v903, 1.442695
    %v924 = vpow.pop %v923
    %v925 = vmul.f32 %v904, 1.442695
    %v926 = vpow.pop %v925
    %v927 = vmul.f32 %v905, 1.442695
    %v928 = vpow.pop %v927
    %v929 = vmul.f32 %v906, 1.442695
    %v930 = vpow.pop %v929
    %v931 = vmul.f32 %v907, 1.442695
    %v932 = vpow.pop %v931
    %v933 = vmul.f32 %v908, 1.442695
    %v934 = vpow.pop %v933
    %v935 = vmul.f32 %v909, 1.442695
    %v936 = vpow.pop %v935
    %v937 = vmul.f32 %v910, 1.442695
    %v938 = vpow.pop %v937
    %v939 = vmul.f32 %v911, 1.442695
    %v940 = vpow.pop %v939
    %v941 = vmul.f32 %v912, 1.442695
    %v942 = vpow.pop %v941
    %v943 = vmul.f32 %v913, 1.442695
    %v944 = vpow.pop %v943
    %v945 = vmul.f32 %v914, 1.442695
    %v946 = vpow.pop %v945
    %947 = vadd.xlane.f32.xlu0 %v916
    %v948 = vpop.xlane.xlu0 %947
    %949 = vadd.xlane.f32.xlu0 %v918
    %v950 = vpop.xlane.xlu0 %949
    %951 = vadd.xlane.f32.xlu0 %v920
    %v952 = vpop.xlane.xlu0 %951
    %953 = vadd.xlane.f32.xlu0 %v922
    %v954 = vpop.xlane.xlu0 %953
    %955 = vadd.xlane.f32.xlu0 %v924
    %v956 = vpop.xlane.xlu0 %955
    %957 = vadd.xlane.f32.xlu0 %v926
    %v958 = vpop.xlane.xlu0 %957
    %959 = vadd.xlane.f32.xlu0 %v928
    %v960 = vpop.xlane.xlu0 %959
    %961 = vadd.xlane.f32.xlu0 %v930
    %v962 = vpop.xlane.xlu0 %961
    %963 = vadd.xlane.f32.xlu0 %v932
    %v964 = vpop.xlane.xlu0 %963
    %965 = vadd.xlane.f32.xlu0 %v934
    %v966 = vpop.xlane.xlu0 %965
    %967 = vadd.xlane.f32.xlu0 %v936
    %v968 = vpop.xlane.xlu0 %967
    %969 = vadd.xlane.f32.xlu0 %v938
    %v970 = vpop.xlane.xlu0 %969
    %971 = vadd.xlane.f32.xlu0 %v940
    %v972 = vpop.xlane.xlu0 %971
    %973 = vadd.xlane.f32.xlu0 %v942
    %v974 = vpop.xlane.xlu0 %973
    %975 = vadd.xlane.f32.xlu0 %v944
    %v976 = vpop.xlane.xlu0 %975
    %977 = vadd.xlane.f32.xlu0 %v946
    %v978 = vpop.xlane.xlu0 %977
    %v979 = vrcp.pop %v948
    %v980 = vrcp.pop %v950
    %v981 = vrcp.pop %v952
    %v982 = vrcp.pop %v954
    %v983 = vrcp.pop %v956
    %v984 = vrcp.pop %v958
    %v985 = vrcp.pop %v960
    %v986 = vrcp.pop %v962
    %v987 = vrcp.pop %v964
    %v988 = vrcp.pop %v966
    %v989 = vrcp.pop %v968
    %v990 = vrcp.pop %v970
    %v991 = vrcp.pop %v972
    %v992 = vrcp.pop %v974
    %v993 = vrcp.pop %v976
    %v994 = vrcp.pop %v978
    %995 = vxpose.xlu0.b32.start [1/16] %v979, 128
    %996 = vxpose.xlu0.b32.cont [2/16] %v980, 128
    %997 = vxpose.xlu0.b32.cont [3/16] %v981, 128
    %998 = vxpose.xlu0.b32.cont [4/16] %v982, 128
    %999 = vxpose.xlu0.b32.cont [5/16] %v983, 128
    %1000 = vxpose.xlu0.b32.cont [6/16] %v984, 128
    %1001 = vxpose.xlu0.b32.cont [7/16] %v985, 128
    %1002 = vxpose.xlu0.b32.cont [8/16] %v986, 128
    %1003 = vxpose.xlu0.b32.cont [9/16] %v987, 128
    %1004 = vxpose.xlu0.b32.cont [10/16] %v988, 128
    %1005 = vxpose.xlu0.b32.cont [11/16] %v989, 128
    %1006 = vxpose.xlu0.b32.cont [12/16] %v990, 128
    %1007 = vxpose.xlu0.b32.cont [13/16] %v991, 128
    %1008 = vxpose.xlu0.b32.cont [14/16] %v992, 128
    %1009 = vxpose.xlu0.b32.cont [15/16] %v993, 128
    %1010 = vxpose.xlu0.b32.end [16/16] %v994, 128
    %v1011 = vpop.trf.xlu0
    %v1012 = vpop.trf.xlu0
    %v1013 = vpop.trf.xlu0
    %v1014 = vpop.trf.xlu0
    %v1015 = vpop.trf.xlu0
    %v1016 = vpop.trf.xlu0
    %v1017 = vpop.trf.xlu0
    %v1018 = vpop.trf.xlu0
    %v1019 = vpop.trf.xlu0
    %v1020 = vpop.trf.xlu0
    %v1021 = vpop.trf.xlu0
    %v1022 = vpop.trf.xlu0
    %v1023 = vpop.trf.xlu0
    %v1024 = vpop.trf.xlu0
    %v1025 = vpop.trf.xlu0
    %v1026 = vpop.trf.xlu0
    %v1027 = vpack.c.bf16 %v918, %v916
    %v1028 = vpack.c.bf16 %v922, %v920
    %v1029 = vpack.c.bf16 %v926, %v924
    %v1030 = vpack.c.bf16 %v930, %v928
    %v1031 = vpack.c.bf16 %v934, %v932
    %v1032 = vpack.c.bf16 %v938, %v936
    %v1033 = vpack.c.bf16 %v942, %v940
    %v1034 = vpack.c.bf16 %v946, %v944
    %v1035 = vpack.c.bf16 %v1011, %v1011
    %1036 = vmatprep.subr.bf16.mxu0 0
    %1037 = vmatpush1.bf16.msra.mxu0 %v1027
    %1038 = vmatprep.subr.bf16.mxu0 0
    %1039 = vmatpush1.bf16.msra.mxu0 %v1028
    %1040 = vmatprep.subr.bf16.mxu0 0
    %1041 = vmatpush1.bf16.msra.mxu0 %v1029
    %1042 = vmatprep.subr.bf16.mxu0 0
    %1043 = vmatpush1.bf16.msra.mxu0 %v1030
    %1044 = vmatprep.subr.bf16.mxu0 0
    %1045 = vmatpush1.bf16.msra.mxu0 %v1031
    %1046 = vmatprep.subr.bf16.mxu0 0
    %1047 = vmatpush1.bf16.msra.mxu0 %v1032
    %1048 = vmatprep.subr.bf16.mxu0 0
    %1049 = vmatpush1.bf16.msra.mxu0 %v1033
    %1050 = vmatprep.subr.bf16.mxu0 0
    %1051 = vmatpush1.bf16.msra.mxu0 %v1034
    %1052 = vmatprep.subr.bf16.mxu0 0
    %1053 = vmatpush1.bf16.msra.mxu0 0
    %1054 = vmatprep.subr.bf16.mxu0 0
    %1055 = vmatpush1.bf16.msra.mxu0 0
    %1056 = vmatprep.subr.bf16.mxu0 0
    %1057 = vmatpush1.bf16.msra.mxu0 0
    %1058 = vmatprep.subr.bf16.mxu0 0
    %1059 = vmatpush1.bf16.msra.mxu0 0
    %1060 = vmatprep.subr.bf16.mxu0 0
    %1061 = vmatpush1.bf16.msra.mxu0 0
    %1062 = vmatprep.subr.bf16.mxu0 0
    %1063 = vmatpush1.bf16.msra.mxu0 0
    %1064 = vmatprep.subr.bf16.mxu0 0
    %1065 = vmatpush1.bf16.msra.mxu0 0
    %1066 = vmatprep.subr.bf16.mxu0 0
    %1067 = vmatpush1.bf16.msra.mxu0 0
    %1068 = vmatprep.mubr.bf16.mxu0 0
    %1069 = vmatmul.mubr.bf16.gmra.mrb[0].mxu0 %v1035
    %v1070 = vpop.f32.mrb[0].mxu0
    %v1071 = vadd.f32 1e-09, %v1070
    %v1072 = vpop.f32.mrb[0].mxu0
    %v1073 = vpop.f32.mrb[0].mxu0
    %v1074 = vpop.f32.mrb[0].mxu0
    %1075 = vdwg.mxu0
    %v1076 = vrcp.pop %v1071
    %v1077 = vmul.f32 1.0, %v1076
    %v1078 = vlaneseq
    %v1079 = vshrl.u32 %v1078, 7
    %v1080 = vsub.s32 0, %v1079
    %v1081 = vrot.slane %v1011, %v1080
    %v1082 = vmul.f32 %v714, %v1081
    %v1083 = vmul.f32 %v717, %v1081
    %v1084 = vmul.f32 %v722, %v1081
    %v1085 = vmul.f32 %v725, %v1081
    %v1086 = vpack.c.bf16 %v1083, %v1082
    %v1087 = vpack.c.bf16 %v1085, %v1084
    %1088 = vmatprep.subr.bf16.mxu0 0
    %1089 = vmatpush1.bf16.msra.mxu0 %v1027
    %1090 = vmatprep.subr.bf16.mxu0 0
    %1091 = vmatpush1.bf16.msra.mxu0 %v1028
    %1092 = vmatprep.subr.bf16.mxu0 0
    %1093 = vmatpush1.bf16.msra.mxu0 %v1029
    %1094 = vmatprep.subr.bf16.mxu0 0
    %1095 = vmatpush1.bf16.msra.mxu0 %v1030
    %1096 = vmatprep.subr.bf16.mxu0 0
    %1097 = vmatpush1.bf16.msra.mxu0 %v1031
    %1098 = vmatprep.subr.bf16.mxu0 0
    %1099 = vmatpush1.bf16.msra.mxu0 %v1032
    %1100 = vmatprep.subr.bf16.mxu0 0
    %1101 = vmatpush1.bf16.msra.mxu0 %v1033
    %1102 = vmatprep.subr.bf16.mxu0 0
    %1103 = vmatpush1.bf16.msra.mxu0 %v1034
    %1104 = vmatprep.subr.bf16.mxu0 0
    %1105 = vmatpush1.bf16.msra.mxu0 0
    %1106 = vmatprep.subr.bf16.mxu0 0
    %1107 = vmatpush1.bf16.msra.mxu0 0
    %1108 = vmatprep.subr.bf16.mxu0 0
    %1109 = vmatpush1.bf16.msra.mxu0 0
    %1110 = vmatprep.subr.bf16.mxu0 0
    %1111 = vmatpush1.bf16.msra.mxu0 0
    %1112 = vmatprep.subr.bf16.mxu0 0
    %1113 = vmatpush1.bf16.msra.mxu0 0
    %1114 = vmatprep.subr.bf16.mxu0 0
    %1115 = vmatpush1.bf16.msra.mxu0 0
    %1116 = vmatprep.subr.bf16.mxu0 0
    %1117 = vmatpush1.bf16.msra.mxu0 0
    %1118 = vmatprep.subr.bf16.mxu0 0
    %1119 = vmatpush1.bf16.msra.mxu0 0
    %1120 = vmatprep.mubr.bf16.mxu0 0
    %1121 = vmatmul.mubr.bf16.gmra.mrb[0].mxu0 %v1086
    %v1122 = vpop.f32.mrb[0].mxu0
    %v1123 = vadd.f32 0.0, %v1122
    %v1124 = vpop.f32.mrb[0].mxu0
    %v1125 = vpop.f32.mrb[0].mxu0
    %v1126 = vadd.f32 0.0, %v1125
    %v1127 = vpop.f32.mrb[0].mxu0
    %1128 = vmatprep.mubr.bf16.mxu0 0
    %1129 = vmatmul.mubr.bf16.gmra.mrb[0].mxu0 %v1087
    %v1130 = vpop.f32.mrb[0].mxu0
    %v1131 = vadd.f32 0.0, %v1130
    %v1132 = vpop.f32.mrb[0].mxu0
    %v1133 = vpop.f32.mrb[0].mxu0
    %v1134 = vadd.f32 0.0, %v1133
    %v1135 = vpop.f32.mrb[0].mxu0
    %1136 = vdwg.mxu0
    %v1137 = vlaneseq
    %v1138 = vshrl.u32 %v1137, 7
    %v1139 = vsub.s32 0, %v1138
    %v1140 = vrot.slane %v1077, %v1139
    %v1141 = vmul.f32 %v1123, %v1140
    %v1142 = vmul.f32 %v1126, %v1140
    %v1143 = vmul.f32 %v1131, %v1140
    %v1144 = vmul.f32 %v1134, %v1140
    %v1145 = vsub.f32 %v673, %v1141
    %v1146 = vsub.f32 %v674, %v1142
    %v1147 = vsub.f32 %v675, %v1143
    %v1148 = vsub.f32 %v676, %v1144
    %v1149 = vpack.c.bf16 %v1146, %v1145
    %v1150 = vpack.c.bf16 %v1148, %v1147
    %1151 = vmatprep.subr.bf16.mxu0 0
    %1152 = vmatpush1.bf16.msra.mxu0 %v1149
    %1153 = vmatprep.subr.bf16.mxu0 0
    %1154 = vmatpush1.bf16.msra.mxu0 %v1150
    %1155 = vmatprep.subr.bf16.mxu0 0
    %1156 = vmatpush1.bf16.msra.mxu0 0
    %1157 = vmatprep.subr.bf16.mxu0 0
    %1158 = vmatpush1.bf16.msra.mxu0 0
    %1159 = vmatprep.subr.bf16.mxu0 0
    %1160 = vmatpush1.bf16.msra.mxu0 0
    %1161 = vmatprep.subr.bf16.mxu0 0
    %1162 = vmatpush1.bf16.msra.mxu0 0
    %1163 = vmatprep.subr.bf16.mxu0 0
    %1164 = vmatpush1.bf16.msra.mxu0 0
    %1165 = vmatprep.subr.bf16.mxu0 0
    %1166 = vmatpush1.bf16.msra.mxu0 0
    %1167 = vmatprep.subr.bf16.mxu0 0
    %1168 = vmatpush1.bf16.msra.mxu0 0
    %1169 = vmatprep.subr.bf16.mxu0 0
    %1170 = vmatpush1.bf16.msra.mxu0 0
    %1171 = vmatprep.subr.bf16.mxu0 0
    %1172 = vmatpush1.bf16.msra.mxu0 0
    %1173 = vmatprep.subr.bf16.mxu0 0
    %1174 = vmatpush1.bf16.msra.mxu0 0
    %1175 = vmatprep.subr.bf16.mxu0 0
    %1176 = vmatpush1.bf16.msra.mxu0 0
    %1177 = vmatprep.subr.bf16.mxu0 0
    %1178 = vmatpush1.bf16.msra.mxu0 0
    %1179 = vmatprep.subr.bf16.mxu0 0
    %1180 = vmatpush1.bf16.msra.mxu0 0
    %1181 = vmatprep.subr.bf16.mxu0 0
    %1182 = vmatpush1.bf16.msra.mxu0 0
    %1183 = vmatprep.mubr.bf16.mxu0 0
    %1184 = vmatmul.mubr.bf16.gmra.mrb[0].mxu0 %v586
    %v1185 = vpop.f32.mrb[0].mxu0
    %v1186 = vadd.f32 %v558, %v1185
    %v1187 = vpop.f32.mrb[0].mxu0
    %v1188 = vpop.f32.mrb[0].mxu0
    %v1189 = vadd.f32 %v563, %v1188
    %v1190 = vpop.f32.mrb[0].mxu0
    %1191 = vmatprep.mubr.bf16.mxu0 0
    %1192 = vmatmul.mubr.bf16.gmra.mrb[0].mxu0 %v589
    %v1193 = vpop.f32.mrb[0].mxu0
    %v1194 = vadd.f32 %v568, %v1193
    %v1195 = vpop.f32.mrb[0].mxu0
    %v1196 = vpop.f32.mrb[0].mxu0
    %v1197 = vadd.f32 %v573, %v1196
    %v1198 = vpop.f32.mrb[0].mxu0
    %1199 = vdwg.mxu0
    %s1200 = scalar_lea.vmem [#allocation2], 32
    %1201 = vst [vmem:[%s1200] sm:$0xff] %v1186
    %1202 = vst [vmem:[%s1200 + $0x8] sm:$0xff] %v1189
    %1203 = vst [vmem:[%s1200 + $0x10] sm:$0xff] %v1194
    %1204 = vst [vmem:[%s1200 + $0x18] sm:$0xff] %v1197
    %1205 = vadd.xlane.f32.xlu0 %v1186
    %v1206 = vpop.xlane.xlu0 %1205
    %1207 = vadd.xlane.f32.xlu0 %v1189
    %v1208 = vpop.xlane.xlu0 %1207
    %1209 = vadd.xlane.f32.xlu0 %v1194
    %v1210 = vpop.xlane.xlu0 %1209
    %1211 = vadd.xlane.f32.xlu0 %v1197
    %v1212 = vpop.xlane.xlu0 %1211
    %v1213 = vadd.f32 %v652, %v1206
    %v1214 = vadd.f32 %v653, %v1208
    %v1215 = vadd.f32 %v654, %v1210
    %v1216 = vadd.f32 %v655, %v1212
    %v1217 = vmul.f32 %v1186, %v1186
    %v1218 = vmul.f32 %v1189, %v1189
    %v1219 = vmul.f32 %v1194, %v1194
    %v1220 = vmul.f32 %v1197, %v1197
    %1221 = vadd.xlane.f32.xlu0 %v1217
    %v1222 = vpop.xlane.xlu0 %1221
    %1223 = vadd.xlane.f32.xlu0 %v1218
    %v1224 = vpop.xlane.xlu0 %1223
    %1225 = vadd.xlane.f32.xlu0 %v1219
    %v1226 = vpop.xlane.xlu0 %1225
    %1227 = vadd.xlane.f32.xlu0 %v1220
    %v1228 = vpop.xlane.xlu0 %1227
    %v1229 = vadd.f32 %v668, %v1222
    %v1230 = vadd.f32 %v669, %v1224
    %v1231 = vadd.f32 %v670, %v1226
    %v1232 = vadd.f32 %v671, %v1228
    %vm1233 = vcmask 7168
    %1234 = vst.msk [vmem:[%s6] sm:$0xff] %vm1233, %v1213
    %1235 = vst.msk [vmem:[%s6 + $0x8] sm:$0xff] %vm1233, %v1214
    %1236 = vst.msk [vmem:[%s6 + $0x10] sm:$0xff] %vm1233, %v1215
    %1237 = vst.msk [vmem:[%s6 + $0x18] sm:$0xff] %vm1233, %v1216
    %vm1238 = vcmask 15368
    %1239 = vst.msk [vmem:[%s6] sm:$0xff] %vm1238, %v1229
    %1240 = vst.msk [vmem:[%s6 + $0x8] sm:$0xff] %vm1238, %v1230
    %1241 = vst.msk [vmem:[%s6 + $0x10] sm:$0xff] %vm1238, %v1231
    %1242 = vst.msk [vmem:[%s6 + $0x18] sm:$0xff] %vm1238, %v1232
    // Predicated region
    $region22: #{point_sac_forward.2} parent=1 // pred_check
      _
    $region23: #{point_sac_forward.2} parent=1 // pred_check_branch
      %1244 = sbr.rel (0) target = $region25
    $region24: #{point_sac_forward.2} parent=1 // pred_region
      %s1246 = ssub.s32 1024, 1024
      %1247 = vsyncadd [#allocation3], %s1246
      %s1248 = sshll.u32 [#allocation2], 4
      %s1249 = int_to_ptr.vmem [resolvable:$true] %s1248
      %1254 = dma.vmem_to_hbm [thread:$0]  %s1249, 1024, %s5, [#allocation3], 128, 128, 8
    $region25: #{point_sac_forward.2} parent=1 // pred_fallthru
      _
    // Predicated region
    $region26: #{point_sac_forward.2} parent=1 // pred_check
      _
    $region27: #{point_sac_forward.2} parent=1 // pred_check_branch
      %1256 = sbr.rel (0) target = $region29
    $region28: #{point_sac_forward.2} parent=1 // pred_region
      _
    $region29: #{point_sac_forward.2} parent=1 // pred_fallthru
      _
    // Predicated region
    $region30: #{point_sac_forward.2} parent=1 // pred_check
      _
    $region31: #{point_sac_forward.2} parent=1 // pred_check_branch
      %1258 = sbr.rel (0) target = $region33
    $region32: #{point_sac_forward.2} parent=1 // pred_region
      %1259 = dma.done [#allocation3], 1024
    $region33: #{point_sac_forward.2} parent=1 // pred_fallthru
      _
    // Predicated region
    $region34: #{point_sac_forward.2} parent=1 // pred_check
      _
    $region35: #{point_sac_forward.2} parent=1 // pred_check_branch
      %1261 = sbr.rel (0) target = $region37
    $region36: #{point_sac_forward.2} parent=1 // pred_region
      _
    $region37: #{point_sac_forward.2} parent=1 // pred_fallthru
      _
    %1262 = vsyncpa [#allocation3], 1

// kernel: point_sac_forward.3
$region0: #{point_sac_forward.3}
  #allocation0 [shape = 'u32[]', space=smem, size = 0x4, offset = 0x4, fixed_abs, tag = 'smem constant byte address 0x4 - core index']
  #allocation1 [shape = 'u32[144,128]{1,0:T(1,128)}', space=vmem, size = 0x12000, scoped, tag = 'internal scratch']
  %s0 = inlined_call_operand.vmem [shape: f32[2,32,128], index: 0, kind: input, shape index: {}]
  %s1 = inlined_call_operand.hbm [shape: f32[2,32,128], index: 1, kind: input, shape index: {}, may-alias: {1,3}]
  %s2 = inlined_call_operand.vmem [shape: f32[4,32,1], index: 2, kind: input, shape index: {}]
  %s3 = inlined_call_operand.hbm [shape: f32[2,32,128], index: 3, kind: output, shape index: {}, may-alias: {1,3}]
  %s4 = sld [smem:[#allocation0]]
  $region26: #{point_sac_forward.3} parent=0
    _
  %s6 = ssub.s32 1, %s4
  %s7 = scalar_select 0, %s6, %s4
  $region1: #{point_sac_forward.3} parent=0
    #allocation2 [shape = 'u8[32768]{0}', space=vmem, size = 0x8000, scoped, tag = 'input window, operand 1, single buffered']
    #allocation3 [shape = 's32[1]{0}', space=sflag, size = 0x4, scoped, tag = 'scoped memory for point_sac_forward.3']
    #allocation4 [shape = 's32[1]{0}', space=sflag, size = 0x4, scoped, tag = 'scoped memory for point_sac_forward.3']
    #allocation5 [shape = 'u8[32768]{0}', space=vmem, size = 0x8000, scoped, tag = 'output window, operand 0, single buffered']
    %8 = vsyncpa [#allocation3], 0
    %9 = vsyncpa [#allocation4], 0
    // Predicated region
    $region2: #{point_sac_forward.3} parent=1 // pred_check
      _
    $region3: #{point_sac_forward.3} parent=1 // pred_check_branch
      %11 = sbr.rel (0) target = $region5
    $region4: #{point_sac_forward.3} parent=1 // pred_region
      _
    $region5: #{point_sac_forward.3} parent=1 // pred_fallthru
      _
    // Predicated region
    $region6: #{point_sac_forward.3} parent=1 // pred_check
      _
    $region7: #{point_sac_forward.3} parent=1 // pred_check_branch
      %13 = sbr.rel (0) target = $region9
    $region8: #{point_sac_forward.3} parent=1 // pred_region
      %s15 = ssub.s32 1024, 1024
      %16 = vsyncadd [#allocation3], %s15
      %s17 = sshll.u32 [#allocation2], 4
      %s18 = int_to_ptr.vmem [resolvable:$true] %s17
      %23 = dma.hbm_to_vmem [thread:$0]  %s1, 1024, %s18, [#allocation3], 128, 128, 8
    $region9: #{point_sac_forward.3} parent=1 // pred_fallthru
      _
    // Predicated region
    $region10: #{point_sac_forward.3} parent=1 // pred_check
      _
    $region11: #{point_sac_forward.3} parent=1 // pred_check_branch
      %25 = sbr.rel (0) target = $region13
    $region12: #{point_sac_forward.3} parent=1 // pred_region
      _
    $region13: #{point_sac_forward.3} parent=1 // pred_fallthru
      _
    // Predicated region
    $region14: #{point_sac_forward.3} parent=1 // pred_check
      _
    $region15: #{point_sac_forward.3} parent=1 // pred_check_branch
      %27 = sbr.rel (0) target = $region17
    $region16: #{point_sac_forward.3} parent=1 // pred_region
      %28 = dma.done [#allocation3], 1024
    $region17: #{point_sac_forward.3} parent=1 // pred_fallthru
      _
    %v29 = vld [vmem:[%s2] sm:$0xff]
    %v30 = vld [vmem:[%s2 + $0x8] sm:$0xff]
    %v31 = vld [vmem:[%s2 + $0x10] sm:$0xff]
    %v32 = vld [vmem:[%s2 + $0x18] sm:$0xff]
    %v33 = vld [vmem:[%s2 + $0x20] sm:$0xff]
    %v34 = vld [vmem:[%s2 + $0x28] sm:$0xff]
    %v35 = vld [vmem:[%s2 + $0x30] sm:$0xff]
    %v36 = vld [vmem:[%s2 + $0x38] sm:$0xff]
    %v37 = vld [vmem:[%s2 + $0x40] sm:$0xff]
    %v38 = vld [vmem:[%s2 + $0x48] sm:$0xff]
    %v39 = vld [vmem:[%s2 + $0x50] sm:$0xff]
    %v40 = vld [vmem:[%s2 + $0x58] sm:$0xff]
    %v41 = vld [vmem:[%s2 + $0x60] sm:$0xff]
    %v42 = vld [vmem:[%s2 + $0x68] sm:$0xff]
    %v43 = vld [vmem:[%s2 + $0x70] sm:$0xff]
    %v44 = vld [vmem:[%s2 + $0x78] sm:$0xff]
    %v45 = vld [vmem:[#allocation2] sm:$0xff]
    %v46 = vld [vmem:[#allocation2 + $0x8] sm:$0xff]
    %v47 = vld [vmem:[#allocation2 + $0x10] sm:$0xff]
    %v48 = vld [vmem:[#allocation2 + $0x18] sm:$0xff]
    %v49 = vld [vmem:[#allocation2 + $0x20] sm:$0xff]
    %v50 = vld [vmem:[#allocation2 + $0x28] sm:$0xff]
    %v51 = vld [vmem:[#allocation2 + $0x30] sm:$0xff]
    %v52 = vld [vmem:[#allocation2 + $0x38] sm:$0xff]
    %54 = vset.pattern.permute.xlu0 0
    %55 = vperm.xlu0 %54, %v29
    %v56 = vpop.permute.xlu0 %55
    %59 = vset.pattern.permute.xlu0 0
    %60 = vperm.xlu0 %59, %v30
    %v61 = vpop.permute.xlu0 %60
    %64 = vset.pattern.permute.xlu0 0
    %65 = vperm.xlu0 %64, %v31
    %v66 = vpop.permute.xlu0 %65
    %69 = vset.pattern.permute.xlu0 0
    %70 = vperm.xlu0 %69, %v32
    %v71 = vpop.permute.xlu0 %70
    %v73 = vmul.f32 %v45, %v56
    %v74 = vmul.f32 %v46, %v61
    %v75 = vmul.f32 %v47, %v66
    %v76 = vmul.f32 %v48, %v71
    %v77 = vmul.f32 %v49, %v56
    %v78 = vmul.f32 %v50, %v61
    %v79 = vmul.f32 %v51, %v66
    %v80 = vmul.f32 %v52, %v71
    %82 = vset.pattern.permute.xlu0 0
    %83 = vperm.xlu0 %82, %v33
    %v84 = vpop.permute.xlu0 %83
    %87 = vset.pattern.permute.xlu0 0
    %88 = vperm.xlu0 %87, %v34
    %v89 = vpop.permute.xlu0 %88
    %92 = vset.pattern.permute.xlu0 0
    %93 = vperm.xlu0 %92, %v35
    %v94 = vpop.permute.xlu0 %93
    %97 = vset.pattern.permute.xlu0 0
    %98 = vperm.xlu0 %97, %v36
    %v99 = vpop.permute.xlu0 %98
    %v101 = vadd.f32 %v73, %v84
    %v102 = vadd.f32 %v74, %v89
    %v103 = vadd.f32 %v75, %v94
    %v104 = vadd.f32 %v76, %v99
    %v105 = vadd.f32 %v77, %v84
    %v106 = vadd.f32 %v78, %v89
    %v107 = vadd.f32 %v79, %v94
    %v108 = vadd.f32 %v80, %v99
    %v109 = vmax.f32 %v101, 0.0
    %v110 = vmax.f32 %v102, 0.0
    %v111 = vmax.f32 %v103, 0.0
    %v112 = vmax.f32 %v104, 0.0
    %v113 = vmax.f32 %v105, 0.0
    %v114 = vmax.f32 %v106, 0.0
    %v115 = vmax.f32 %v107, 0.0
    %v116 = vmax.f32 %v108, 0.0
    %v117 = vld [vmem:[%s0] sm:$0xff]
    %v118 = vld [vmem:[%s0 + $0x8] sm:$0xff]
    %v119 = vld [vmem:[%s0 + $0x10] sm:$0xff]
    %v120 = vld [vmem:[%s0 + $0x18] sm:$0xff]
    %v121 = vld [vmem:[%s0 + $0x20] sm:$0xff]
    %v122 = vld [vmem:[%s0 + $0x28] sm:$0xff]
    %v123 = vld [vmem:[%s0 + $0x30] sm:$0xff]
    %v124 = vld [vmem:[%s0 + $0x38] sm:$0xff]
    %126 = vset.pattern.permute.xlu0 0
    %127 = vperm.xlu0 %126, %v37
    %v128 = vpop.permute.xlu0 %127
    %131 = vset.pattern.permute.xlu0 0
    %132 = vperm.xlu0 %131, %v38
    %v133 = vpop.permute.xlu0 %132
    %136 = vset.pattern.permute.xlu0 0
    %137 = vperm.xlu0 %136, %v39
    %v138 = vpop.permute.xlu0 %137
    %141 = vset.pattern.permute.xlu0 0
    %142 = vperm.xlu0 %141, %v40
    %v143 = vpop.permute.xlu0 %142
    %v145 = vmul.f32 %v128, %v109
    %v146 = vmul.f32 %v133, %v110
    %v147 = vmul.f32 %v138, %v111
    %v148 = vmul.f32 %v143, %v112
    %v149 = vmul.f32 %v128, %v113
    %v150 = vmul.f32 %v133, %v114
    %v151 = vmul.f32 %v138, %v115
    %v152 = vmul.f32 %v143, %v116
    %v153 = vadd.f32 %v117, %v145
    %v154 = vadd.f32 %v118, %v146
    %v155 = vadd.f32 %v119, %v147
    %v156 = vadd.f32 %v120, %v148
    %v157 = vadd.f32 %v121, %v149
    %v158 = vadd.f32 %v122, %v150
    %v159 = vadd.f32 %v123, %v151
    %v160 = vadd.f32 %v124, %v152
    %162 = vset.pattern.permute.xlu0 0
    %163 = vperm.xlu0 %162, %v41
    %v164 = vpop.permute.xlu0 %163
    %167 = vset.pattern.permute.xlu0 0
    %168 = vperm.xlu0 %167, %v42
    %v169 = vpop.permute.xlu0 %168
    %172 = vset.pattern.permute.xlu0 0
    %173 = vperm.xlu0 %172, %v43
    %v174 = vpop.permute.xlu0 %173
    %177 = vset.pattern.permute.xlu0 0
    %178 = vperm.xlu0 %177, %v44
    %v179 = vpop.permute.xlu0 %178
    %v181 = vadd.f32 %v153, %v164
    %v182 = vadd.f32 %v154, %v169
    %v183 = vadd.f32 %v155, %v174
    %v184 = vadd.f32 %v156, %v179
    %v185 = vadd.f32 %v157, %v164
    %v186 = vadd.f32 %v158, %v169
    %v187 = vadd.f32 %v159, %v174
    %v188 = vadd.f32 %v160, %v179
    %189 = vst [vmem:[#allocation5] sm:$0xff] %v181
    %190 = vst [vmem:[#allocation5 + $0x8] sm:$0xff] %v182
    %191 = vst [vmem:[#allocation5 + $0x10] sm:$0xff] %v183
    %192 = vst [vmem:[#allocation5 + $0x18] sm:$0xff] %v184
    %193 = vst [vmem:[#allocation5 + $0x20] sm:$0xff] %v185
    %194 = vst [vmem:[#allocation5 + $0x28] sm:$0xff] %v186
    %195 = vst [vmem:[#allocation5 + $0x30] sm:$0xff] %v187
    %196 = vst [vmem:[#allocation5 + $0x38] sm:$0xff] %v188
    // Predicated region
    $region18: #{point_sac_forward.3} parent=1 // pred_check
      _
    $region19: #{point_sac_forward.3} parent=1 // pred_check_branch
      %198 = sbr.rel (0) target = $region21
    $region20: #{point_sac_forward.3} parent=1 // pred_region
      %s200 = ssub.s32 1024, 1024
      %201 = vsyncadd [#allocation4], %s200
      %s202 = sshll.u32 [#allocation5], 4
      %s203 = int_to_ptr.vmem [resolvable:$true] %s202
      %208 = dma.vmem_to_hbm [thread:$0]  %s203, 1024, %s3, [#allocation4], 128, 128, 8
    $region21: #{point_sac_forward.3} parent=1 // pred_fallthru
      _
    // Predicated region
    $region22: #{point_sac_forward.3} parent=1 // pred_check
      _
    $region23: #{point_sac_forward.3} parent=1 // pred_check_branch
      %210 = sbr.rel (0) target = $region25
    $region24: #{point_sac_forward.3} parent=1 // pred_region
      %211 = dma.done [#allocation4], 1024
    $region25: #{point_sac_forward.3} parent=1 // pred_fallthru
      _
    %212 = vsyncpa [#allocation3], 1
    %213 = vsyncpa [#allocation4], 1

</llo_original>
